<compile_context>
chip_gen: v6e
topology: v6e:2x2x1
jax: 0.10.0
libtpu: 0.0.40
codegen_flags: <defaults>
</compile_context>

<pallas_src>
import functools

import jax
import jax.numpy as jnp
from jax.experimental import pallas as pl
from jax.experimental.pallas import tpu as pltpu

MAX_ROW_TILE = 1024
_PARALLEL_1D = pltpu.CompilerParams(dimension_semantics=("parallel",))


# ----------------------------- tiling helpers -----------------------------

def _row_tiling(m, max_tile=MAX_ROW_TILE):
    """Return (row_tile, padded_rows, grid_size) for a row-gridded kernel."""
    if m <= max_tile:
        return m, m, 1
    g = pl.cdiv(m, max_tile)
    return max_tile, g * max_tile, g


def _pad_rows(x, rows):
    if x.shape[0] == rows:
        return x
    return jnp.pad(x, ((0, rows - x.shape[0]),) + ((0, 0),) * (x.ndim - 1))


# ----------------------------- Pallas kernels -----------------------------

def _matmul_kernel(a_ref, b_ref, o_ref):
    o_ref[...] = jnp.dot(a_ref[...], b_ref[...], preferred_element_type=jnp.float32)


def pallas_matmul(a, b):
    """Row-tiled (M-gridded) matmul; K and N are small feature dims and stay whole."""
    M, K = a.shape
    _, N = b.shape
    tm, Mp, g = _row_tiling(M)
    a_p = _pad_rows(a, Mp)
    out = pl.pallas_call(
        _matmul_kernel,
        out_shape=jax.ShapeDtypeStruct((Mp, N), jnp.float32),
        grid=(g,),
        in_specs=[pl.BlockSpec((tm, K), lambda i: (i, 0)),
                  pl.BlockSpec((K, N), lambda i: (0, 0))],
        out_specs=pl.BlockSpec((tm, N), lambda i: (i, 0)),
        compiler_params=_PARALLEL_1D,
    )(a_p, b)
    return out[:M]


def _entity_fuse_kernel(ent_ref, w_ref, gat_ref, mask_ref, o_ref):
    # F.normalize(ent) @ W_entities + mask * gat_out, then F.normalize again -- one pass.
    x = ent_ref[...]
    inv = jax.lax.rsqrt(jnp.maximum(jnp.sum(x * x, axis=1, keepdims=True), 1e-24))
    up = jnp.dot(x * inv, w_ref[...], preferred_element_type=jnp.float32)
    y = up + mask_ref[...] * gat_ref[...]
    inv2 = jax.lax.rsqrt(jnp.maximum(jnp.sum(y * y, axis=1, keepdims=True), 1e-24))
    o_ref[...] = y * inv2


def pallas_entity_fuse(ent, w_entities, gat_out, mask_col):
    N, K = ent.shape
    out_cat = w_entities.shape[1]
    tn, Np, g = _row_tiling(N)
    ent_p = _pad_rows(ent, Np)
    gat_p = _pad_rows(gat_out, Np)
    mask_p = _pad_rows(mask_col, Np)
    out = pl.pallas_call(
        _entity_fuse_kernel,
        out_shape=jax.ShapeDtypeStruct((Np, out_cat), jnp.float32),
        grid=(g,),
        in_specs=[pl.BlockSpec((tn, K), lambda i: (i, 0)),
                  pl.BlockSpec((K, out_cat), lambda i: (0, 0)),
                  pl.BlockSpec((tn, out_cat), lambda i: (i, 0)),
                  pl.BlockSpec((tn, 1), lambda i: (i, 0))],
        out_specs=pl.BlockSpec((tn, out_cat), lambda i: (i, 0)),
        compiler_params=_PARALLEL_1D,
    )(ent_p, w_entities, gat_p, mask_p)
    return out[:N]


def _time_embed_kernel(t2_ref, w_ref, b_ref, o_ref):
    # (tb,1) * (1,H) + (1,H) -> (tb,H); cos on the VPU/EUP
    o_ref[...] = jnp.cos(t2_ref[...] * w_ref[...] + b_ref[...])


def pallas_time_embed(t2_col, weight_t2, bias_t2):
    B = t2_col.shape[0]
    H = weight_t2.shape[1]
    tb, Bp, g = _row_tiling(B)
    t2_p = _pad_rows(t2_col, Bp)
    out = pl.pallas_call(
        _time_embed_kernel,
        out_shape=jax.ShapeDtypeStruct((Bp, H), jnp.float32),
        grid=(g,),
        in_specs=[pl.BlockSpec((tb, 1), lambda i: (i, 0)),
                  pl.BlockSpec((1, H), lambda i: (0, 0)),
                  pl.BlockSpec((1, H), lambda i: (0, 0))],
        out_specs=pl.BlockSpec((tb, H), lambda i: (i, 0)),
        compiler_params=_PARALLEL_1D,
    )(t2_p, weight_t2, bias_t2)
    return out[:B]


def _gat_edge_kernel(xs_ref, xd_ref, e_ref, as_ref, ad_ref, ar_ref, a2_ref, rep_ref,
                     ew_ref, ee_ref, *, alpha):
    # All heads batched.  edge_m = [x_src | x_dst | edge_embed] @ a^T, computed without the concat.
    edge_m = jnp.dot(xs_ref[...], as_ref[...], preferred_element_type=jnp.float32)
    edge_m = edge_m + jnp.dot(xd_ref[...], ad_ref[...], preferred_element_type=jnp.float32)
    edge_m = edge_m + jnp.dot(e_ref[...], ar_ref[...], preferred_element_type=jnp.float32)
    # per-head logit via block-diagonal a2: (te, H*nhid) @ (H*nhid, H) -> (te, H)
    s = jnp.dot(edge_m, a2_ref[...], preferred_element_type=jnp.float32)
    edge_e = jnp.exp(-jnp.where(s > 0.0, s, alpha * s))          # exp(-leaky_relu(s, alpha))
    ee_ref[...] = edge_e
    # replicate each head's weight across its nhid lanes and weight the edge features
    e_exp = jnp.dot(edge_e, rep_ref[...], preferred_element_type=jnp.float32)
    ew_ref[...] = e_exp * edge_m


def pallas_gat_edge(xs, xd, rel_rows, a_src_T, a_dst_T, a_rel_T, a2_bd, rep, alpha):
    E, in_dim = xs.shape
    rel_dim = rel_rows.shape[1]
    HN = a_src_T.shape[1]
    H = rep.shape[0]
    te, Ep, g = _row_tiling(E)
    xs_p, xd_p, e_p = _pad_rows(xs, Ep), _pad_rows(xd, Ep), _pad_rows(rel_rows, Ep)
    edge_w, edge_e = pl.pallas_call(
        functools.partial(_gat_edge_kernel, alpha=alpha),
        out_shape=(jax.ShapeDtypeStruct((Ep, HN), jnp.float32),
                   jax.ShapeDtypeStruct((Ep, H), jnp.float32)),
        grid=(g,),
        in_specs=[pl.BlockSpec((te, in_dim), lambda i: (i, 0)),
                  pl.BlockSpec((te, in_dim), lambda i: (i, 0)),
                  pl.BlockSpec((te, rel_dim), lambda i: (i, 0)),
                  pl.BlockSpec((in_dim, HN), lambda i: (0, 0)),
                  pl.BlockSpec((in_dim, HN), lambda i: (0, 0)),
                  pl.BlockSpec((rel_dim, HN), lambda i: (0, 0)),
                  pl.BlockSpec((HN, H), lambda i: (0, 0)),
                  pl.BlockSpec((H, HN), lambda i: (0, 0))],
        out_specs=(pl.BlockSpec((te, HN), lambda i: (i, 0)),
                   pl.BlockSpec((te, H), lambda i: (i, 0))),
        compiler_params=_PARALLEL_1D,
    )(xs_p, xd_p, e_p, a_src_T, a_dst_T, a_rel_T, a2_bd, rep)
    return edge_w[:E], edge_e[:E]


def _gat_finalize_kernel(hsum_ref, rs_ref, rep_ref, o_ref, *, apply_elu):
    rs = rs_ref[...]
    rs = jnp.where(rs == 0.0, 1e-12, rs)                         # e_rowsum[e_rowsum==0] = 1e-12
    den = jnp.dot(rs, rep_ref[...], preferred_element_type=jnp.float32)   # (tn, H*nhid)
    h = hsum_ref[...] * pl.reciprocal(den, approx=True)
    if apply_elu:
        h = jnp.where(h > 0.0, h, jnp.exp(h) - 1.0)              # ELU(alpha=1)
    o_ref[...] = h


def pallas_gat_finalize(h_sum, e_rowsum, rep, apply_elu):
    N, HN = h_sum.shape
    H = rep.shape[0]
    tn, Np, g = _row_tiling(N)
    hs_p, rs_p = _pad_rows(h_sum, Np), _pad_rows(e_rowsum, Np)
    out = pl.pallas_call(
        functools.partial(_gat_finalize_kernel, apply_elu=apply_elu),
        out_shape=jax.ShapeDtypeStruct((Np, HN), jnp.float32),
        grid=(g,),
        in_specs=[pl.BlockSpec((tn, HN), lambda i: (i, 0)),
                  pl.BlockSpec((tn, H), lambda i: (i, 0)),
                  pl.BlockSpec((H, HN), lambda i: (0, 0))],
        out_specs=pl.BlockSpec((tn, HN), lambda i: (i, 0)),
        compiler_params=_PARALLEL_1D,
    )(hs_p, rs_p, rep)
    return out[:N]


# --------------------------- model forward (glue) ---------------------------

def gat_layer_forward(mats, x, src, dst, rel_rows, alpha, num_nodes, rel_T_override=None):
    """All heads of a KBGAT SpGraphAttentionLayer stage in one fused pass (eval: dropout = id)."""
    a_rel_T = mats["a_rel_T"] if rel_T_override is None else rel_T_override
    # TODO(synk): the row gathers below are data-dependent; left as XLA gathers (a Pallas gather
    #             would need a per-row pl.Element grid step, ~0.35us/step overhead).
    xs = x[src]
    xd = x[dst]
    edge_w, edge_e = pallas_gat_edge(
        xs, xd, rel_rows, mats["a_src_T"], mats["a_dst_T"], a_rel_T,
        mats["a2_bd"], mats["rep"], alpha)
    # TODO(synk): scatter-add aggregation over edge sources has no clean tiled Pallas equivalent
    #             without pre-sorting edges; kept as jax.ops.segment_sum.
    h_sum = jax.ops.segment_sum(edge_w, src, num_segments=num_nodes)        # (N, H*nhid)
    e_rowsum = jax.ops.segment_sum(edge_e, src, num_segments=num_nodes)     # (N, H)
    return pallas_gat_finalize(h_sum, e_rowsum, mats["rep"], apply_elu=True)


def spgat_forward(sp, x, edge_list, edge_type, edge_embed, alpha):
    src, dst = edge_list[0], edge_list[1]
    n = x.shape[0]
    # multi-head stage (concat=True -> per-head ELU); heads batched, output already concatenated
    x1 = gat_layer_forward(sp["att"], x, src, dst, edge_embed, alpha, n)
    # dropout_layer -> identity (eval)
    # out_relation_1 = relation_embed.mm(W); K_Half passes edge_embed as relation_embed and
    # discards this result, so under jit it is DCE'd if unused downstream.
    out_relation_1 = pallas_matmul(edge_embed, sp["W"])
    # Stage-2 relation input is out_relation_1[edge_type] == edge_embed[edge_type] @ W.
    # Fold W into the stage-2 rel projection: (E, out_cat) intermediate never hits HBM and the
    # per-edge gather is rel_dim wide instead of out_cat wide.
    rel2_rows = edge_embed[edge_type]                                       # (E, rel_dim)
    a_rel2_fused = jnp.dot(sp["W"], sp["out_att"]["a_rel_T"],
                           preferred_element_type=jnp.float32)              # (rel_dim, HN2)
    # out_att has concat=False (no internal ELU); SpGAT applies F.elu afterwards -> fused here
    x2 = gat_layer_forward(sp["out_att"], x1, src, dst, rel2_rows, alpha, n,
                           rel_T_override=a_rel2_fused)
    return x2, out_relation_1


def k_half_forward(params, relation_dict, batch_inputs, edge_list, edge_type, alpha=0.2):
    # edge_embed = stack([relation_dict[rel] for rel in edge_type])
    edge_embed = relation_dict[edge_type]                                   # (E, rel_dim)

    ent = params["entity_embeddings"]
    out_gat, _ = spgat_forward(params["spgat"], ent, edge_list, edge_type, edge_embed, alpha)

    # his_temp_embs: for fact i, cos(w*t2_i + b) repeated for every queried head entity
    B = batch_inputs.shape[0]
    t2_col = batch_inputs[:, 3:4].astype(jnp.float32)                       # (B, 1)
    time_rows = pallas_time_embed(t2_col, params["weight_t2"], params["bias_t2"])  # (B, h_dim)
    h_dim = params["weight_t2"].shape[1]
    his_all = jnp.broadcast_to(time_rows[:, None, :], (B, B, h_dim))        # single broadcast
    his_temp_embs = [his_all[i] for i in range(B)]

    # mask over (unique) tail entities of the batch
    tails = batch_inputs[:, 2].astype(jnp.int32)
    mask_col = jnp.zeros((ent.shape[0], 1), jnp.float32).at[tails, 0].set(1.0)

    # fused: F.normalize(ent) @ W_entities + mask * out_gat, then F.normalize (one entity pass)
    out_entity_1 = pallas_entity_fuse(ent, params["W_entities"], out_gat, mask_col)
    return out_entity_1, his_temp_embs


# --------------------------- parameter construction ---------------------------

def xavier_uniform(key, shape, gain=1.414):
    fan_in, fan_out = shape[1], shape[0]
    bound = gain * (6.0 / (fan_in + fan_out)) ** 0.5
    return jax.random.uniform(key, shape, jnp.float32, -bound, bound)


def pack_gat_layer(keys, nheads, in_dim, rel_dim, nhid):
    """Init per-head (a, a_2) like the reference, then pack into kernel-facing pre-transposed mats."""
    a_src, a_dst, a_rel, a2_cols = [], [], [], []
    for h in range(nheads):
        a = xavier_uniform(keys[2 * h], (nhid, 2 * in_dim + rel_dim))
        a2 = xavier_uniform(keys[2 * h + 1], (1, nhid))
        a_src.append(a[:, :in_dim].T)                    # (in, nhid)
        a_dst.append(a[:, in_dim:2 * in_dim].T)          # (in, nhid)
        a_rel.append(a[:, 2 * in_dim:].T)                # (rel, nhid)
        a2_cols.append(a2[0])                            # (nhid,)
    HN = nheads * nhid
    a2_bd = jnp.zeros((HN, nheads), jnp.float32)
    rep = jnp.zeros((nheads, HN), jnp.float32)
    for h in range(nheads):
        a2_bd = a2_bd.at[h * nhid:(h + 1) * nhid, h].set(a2_cols[h])
        rep = rep.at[h, h * nhid:(h + 1) * nhid].set(1.0)
    return {
        "a_src_T": jnp.concatenate(a_src, axis=1),       # (in, H*nhid)
        "a_dst_T": jnp.concatenate(a_dst, axis=1),       # (in, H*nhid)
        "a_rel_T": jnp.concatenate(a_rel, axis=1),       # (rel, H*nhid)
        "a2_bd": a2_bd,                                  # (H*nhid, H) block-diagonal
        "rep": rep,                                      # (H, H*nhid) 0/1 head replication
    }


def build_params(key, num_ents, entity_in_dim, nhid, nheads, h_dim):
    rel_dim = nhid
    out_cat = nhid * nheads
    n_keys = 2 * nheads + 2 + 5
    ks = jax.random.split(key, n_keys)
    att = pack_gat_layer(ks[:2 * nheads], nheads, entity_in_dim, rel_dim, nhid)
    out_att = pack_gat_layer(ks[2 * nheads:2 * nheads + 2], 1, out_cat, out_cat, out_cat)
    k0 = 2 * nheads + 2
    spgat = {
        "att": att,
        "out_att": out_att,
        "W": xavier_uniform(ks[k0], (rel_dim, out_cat)),
    }
    return {
        "entity_embeddings": jax.random.normal(ks[k0 + 1], (num_ents, entity_in_dim), jnp.float32),
        "W_entities": xavier_uniform(ks[k0 + 2], (entity_in_dim, out_cat)),
        "weight_t2": jax.random.normal(ks[k0 + 3], (1, h_dim), jnp.float32),
        "bias_t2": jax.random.normal(ks[k0 + 4], (1, h_dim), jnp.float32),
        "spgat": spgat,
    }


# ----------------------------------- main -----------------------------------

if __name__ == "__main__":
    key = jax.random.PRNGKey(0)

    num_ents = 16
    entity_in_dim = 8
    entity_out_dim = (8, 8)      # entity_out_dim_1 = 8
    nheads_GAT = (2, 2)          # nheads_GAT_1 = 2
    h_dim = 8
    num_rels = 4
    num_edges = 12
    batch = 4
    alpha = 0.2

    params = build_params(key, num_ents, entity_in_dim, entity_out_dim[0], nheads_GAT[0], h_dim)

    k1, k2, k3, k4, k5 = jax.random.split(jax.random.PRNGKey(1), 5)
    relation_dict = jax.random.normal(k1, (num_rels, entity_out_dim[0]), jnp.float32)
    edge_list = jax.random.randint(k2, (2, num_edges), 0, num_ents, dtype=jnp.int32)
    edge_type = jax.random.randint(k3, (num_edges,), 0, num_rels, dtype=jnp.int32)
    heads_col = jax.random.randint(k4, (batch, 1), 0, num_ents, dtype=jnp.int32)
    rels_col = jax.random.randint(k5, (batch, 1), 0, num_rels, dtype=jnp.int32)
    tails_col = jax.random.randint(jax.random.PRNGKey(2), (batch, 1), 0, num_ents, dtype=jnp.int32)
    t2_col = jax.random.randint(jax.random.PRNGKey(3), (batch, 1), 0, 10, dtype=jnp.int32)
    batch_inputs = jnp.concatenate([heads_col, rels_col, tails_col, t2_col], axis=1)  # (B, 4)

    # alpha is a static Python float baked into the kernels; jit everything else.
    forward = jax.jit(functools.partial(k_half_forward, alpha=alpha))

    out_entity_1, his_temp_embs = forward(
        params, relation_dict, batch_inputs, edge_list, edge_type)

    jax.block_until_ready(out_entity_1)
    for h in his_temp_embs:
        jax.block_until_ready(h)

    assert out_entity_1.shape == (num_ents, entity_out_dim[0] * nheads_GAT[0])
    assert len(his_temp_embs) == batch and his_temp_embs[0].shape == (batch, h_dim)
    assert bool(jnp.all(jnp.isfinite(out_entity_1)))
    print("KERNEL_OK")
</pallas_src>

<mosaic_0001>
module attributes {stable_mosaic.version = 11 : i64} {
  func.func @_gat_edge_kernel(%arg0: i32, %arg1: memref<12x8xf32, #tpu.memory_space<vmem>>, %arg2: memref<12x8xf32, #tpu.memory_space<vmem>>, %arg3: memref<12x8xf32, #tpu.memory_space<vmem>>, %arg4: memref<8x16xf32, #tpu.memory_space<vmem>>, %arg5: memref<8x16xf32, #tpu.memory_space<vmem>>, %arg6: memref<8x16xf32, #tpu.memory_space<vmem>>, %arg7: memref<16x2xf32, #tpu.memory_space<vmem>>, %arg8: memref<2x16xf32, #tpu.memory_space<vmem>>, %arg9: memref<12x16xf32, #tpu.memory_space<vmem>>, %arg10: memref<12x2xf32, #tpu.memory_space<vmem>>) attributes {dimension_semantics = [#tpu.dimension_semantics<parallel>], iteration_bounds = array<i64: 1>, scalar_prefetch = 0 : i64, scratch_operands = 0 : i64, tpu.core_type = #tpu.core_type<tc>, window_params = [{transform_indices = @transform_0, window_bounds = array<i64: 12, 8>}, {transform_indices = @transform_1, window_bounds = array<i64: 12, 8>}, {transform_indices = @transform_2, window_bounds = array<i64: 12, 8>}, {pipeline_mode = #tpu.pipeline_mode<synchronous>, transform_indices = @transform_3, window_bounds = array<i64: 8, 16>}, {pipeline_mode = #tpu.pipeline_mode<synchronous>, transform_indices = @transform_4, window_bounds = array<i64: 8, 16>}, {pipeline_mode = #tpu.pipeline_mode<synchronous>, transform_indices = @transform_5, window_bounds = array<i64: 8, 16>}, {pipeline_mode = #tpu.pipeline_mode<synchronous>, transform_indices = @transform_6, window_bounds = array<i64: 16, 2>}, {pipeline_mode = #tpu.pipeline_mode<synchronous>, transform_indices = @transform_7, window_bounds = array<i64: 2, 16>}, {transform_indices = @transform_8, window_bounds = array<i64: 12, 16>}, {transform_indices = @transform_9, window_bounds = array<i64: 12, 2>}]} {
    %c0 = arith.constant 0 : index
    %c0_0 = arith.constant 0 : index
    %0 = vector.load %arg1[%c0, %c0_0] : memref<12x8xf32, #tpu.memory_space<vmem>>, vector<12x8xf32>
    %c0_1 = arith.constant 0 : index
    %c0_2 = arith.constant 0 : index
    %1 = vector.load %arg4[%c0_1, %c0_2] : memref<8x16xf32, #tpu.memory_space<vmem>>, vector<8x16xf32>
    %cst = arith.constant dense<0.000000e+00> : vector<12x16xf32>
    %2 = tpu.matmul %0, %1, %cst {dimension_numbers = #tpu.dot_dimension_numbers<[1], [0], [0], [1], [0, 0, 1, 1], [], []>} : vector<12x8xf32>, vector<8x16xf32>, vector<12x16xf32> -> vector<12x16xf32>
    %c0_3 = arith.constant 0 : index
    %c0_4 = arith.constant 0 : index
    %3 = vector.load %arg2[%c0_3, %c0_4] : memref<12x8xf32, #tpu.memory_space<vmem>>, vector<12x8xf32>
    %c0_5 = arith.constant 0 : index
    %c0_6 = arith.constant 0 : index
    %4 = vector.load %arg5[%c0_5, %c0_6] : memref<8x16xf32, #tpu.memory_space<vmem>>, vector<8x16xf32>
    %cst_7 = arith.constant dense<0.000000e+00> : vector<12x16xf32>
    %5 = tpu.matmul %3, %4, %cst_7 {dimension_numbers = #tpu.dot_dimension_numbers<[1], [0], [0], [1], [0, 0, 1, 1], [], []>} : vector<12x8xf32>, vector<8x16xf32>, vector<12x16xf32> -> vector<12x16xf32>
    %6 = arith.addf %2, %5 : vector<12x16xf32>
    %c0_8 = arith.constant 0 : index
    %c0_9 = arith.constant 0 : index
    %7 = vector.load %arg3[%c0_8, %c0_9] : memref<12x8xf32, #tpu.memory_space<vmem>>, vector<12x8xf32>
    %c0_10 = arith.constant 0 : index
    %c0_11 = arith.constant 0 : index
    %8 = vector.load %arg6[%c0_10, %c0_11] : memref<8x16xf32, #tpu.memory_space<vmem>>, vector<8x16xf32>
    %cst_12 = arith.constant dense<0.000000e+00> : vector<12x16xf32>
    %9 = tpu.matmul %7, %8, %cst_12 {dimension_numbers = #tpu.dot_dimension_numbers<[1], [0], [0], [1], [0, 0, 1, 1], [], []>} : vector<12x8xf32>, vector<8x16xf32>, vector<12x16xf32> -> vector<12x16xf32>
    %10 = arith.addf %6, %9 : vector<12x16xf32>
    %c0_13 = arith.constant 0 : index
    %c0_14 = arith.constant 0 : index
    %11 = vector.load %arg7[%c0_13, %c0_14] : memref<16x2xf32, #tpu.memory_space<vmem>>, vector<16x2xf32>
    %cst_15 = arith.constant dense<0.000000e+00> : vector<12x2xf32>
    %12 = tpu.matmul %10, %11, %cst_15 {dimension_numbers = #tpu.dot_dimension_numbers<[1], [0], [0], [1], [0, 0, 1, 1], [], []>} : vector<12x16xf32>, vector<16x2xf32>, vector<12x2xf32> -> vector<12x2xf32>
    %cst_16 = arith.constant 0.000000e+00 : f32
    %13 = vector.broadcast %cst_16 : f32 to vector<12x2xf32>
    %14 = arith.cmpf ogt, %12, %13 : vector<12x2xf32>
    %cst_17 = arith.constant 2.000000e-01 : f32
    %15 = vector.broadcast %cst_17 : f32 to vector<12x2xf32>
    %16 = arith.mulf %15, %12 : vector<12x2xf32>
    %17 = arith.select %14, %12, %16 : vector<12x2xi1>, vector<12x2xf32>
    %cst_18 = arith.constant 0.000000e+00 : f32
    %18 = vector.broadcast %cst_18 : f32 to vector<12x2xf32>
    %19 = arith.subf %18, %17 : vector<12x2xf32>
    %20 = math.exp %19 : vector<12x2xf32>
    %c0_19 = arith.constant 0 : index
    %c0_20 = arith.constant 0 : index
    %21 = vector.load %arg10[%c0_19, %c0_20] : memref<12x2xf32, #tpu.memory_space<vmem>>, vector<12x2xf32>
    tpu.vector_store %arg10[%c0_19, %c0_20], %20 {strides = array<i32>} : memref<12x2xf32, #tpu.memory_space<vmem>>, vector<12x2xf32>,
    %c0_21 = arith.constant 0 : index
    %c0_22 = arith.constant 0 : index
    %22 = vector.load %arg8[%c0_21, %c0_22] : memref<2x16xf32, #tpu.memory_space<vmem>>, vector<2x16xf32>
    %cst_23 = arith.constant dense<0.000000e+00> : vector<12x16xf32>
    %23 = tpu.matmul %20, %22, %cst_23 {dimension_numbers = #tpu.dot_dimension_numbers<[1], [0], [0], [1], [0, 0, 1, 1], [], []>} : vector<12x2xf32>, vector<2x16xf32>, vector<12x16xf32> -> vector<12x16xf32>
    %24 = arith.mulf %23, %10 : vector<12x16xf32>
    %c0_24 = arith.constant 0 : index
    %c0_25 = arith.constant 0 : index
    %25 = vector.load %arg9[%c0_24, %c0_25] : memref<12x16xf32, #tpu.memory_space<vmem>>, vector<12x16xf32>
    tpu.vector_store %arg9[%c0_24, %c0_25], %24 {strides = array<i32>} : memref<12x16xf32, #tpu.memory_space<vmem>>, vector<12x16xf32>,
    return
  }
  func.func @transform_0(%arg0: i32) -> (i32, i32) {
    %c0_i32 = arith.constant 0 : i32
    %c0_i32_0 = arith.constant 0 : i32
    return %arg0, %c0_i32 : i32, i32
  }
  func.func @transform_1(%arg0: i32) -> (i32, i32) {
    %c0_i32 = arith.constant 0 : i32
    %c0_i32_0 = arith.constant 0 : i32
    return %arg0, %c0_i32 : i32, i32
  }
  func.func @transform_2(%arg0: i32) -> (i32, i32) {
    %c0_i32 = arith.constant 0 : i32
    %c0_i32_0 = arith.constant 0 : i32
    return %arg0, %c0_i32 : i32, i32
  }
  func.func @transform_3(%arg0: i32) -> (i32, i32) {
    %c0_i32 = arith.constant 0 : i32
    %c0_i32_0 = arith.constant 0 : i32
    %c0_i32_1 = arith.constant 0 : i32
    return %c0_i32, %c0_i32_0 : i32, i32
  }
  func.func @transform_4(%arg0: i32) -> (i32, i32) {
    %c0_i32 = arith.constant 0 : i32
    %c0_i32_0 = arith.constant 0 : i32
    %c0_i32_1 = arith.constant 0 : i32
    return %c0_i32, %c0_i32_0 : i32, i32
  }
  func.func @transform_5(%arg0: i32) -> (i32, i32) {
    %c0_i32 = arith.constant 0 : i32
    %c0_i32_0 = arith.constant 0 : i32
    %c0_i32_1 = arith.constant 0 : i32
    return %c0_i32, %c0_i32_0 : i32, i32
  }
  func.func @transform_6(%arg0: i32) -> (i32, i32) {
    %c0_i32 = arith.constant 0 : i32
    %c0_i32_0 = arith.constant 0 : i32
    %c0_i32_1 = arith.constant 0 : i32
    return %c0_i32, %c0_i32_0 : i32, i32
  }
  func.func @transform_7(%arg0: i32) -> (i32, i32) {
    %c0_i32 = arith.constant 0 : i32
    %c0_i32_0 = arith.constant 0 : i32
    %c0_i32_1 = arith.constant 0 : i32
    return %c0_i32, %c0_i32_0 : i32, i32
  }
  func.func @transform_8(%arg0: i32) -> (i32, i32) {
    %c0_i32 = arith.constant 0 : i32
    %c0_i32_0 = arith.constant 0 : i32
    return %arg0, %c0_i32 : i32, i32
  }
  func.func @transform_9(%arg0: i32) -> (i32, i32) {
    %c0_i32 = arith.constant 0 : i32
    %c0_i32_0 = arith.constant 0 : i32
    return %arg0, %c0_i32 : i32, i32
  }
}

module attributes {stable_mosaic.version = 11 : i64} {
  func.func @_gat_finalize_kernel(%arg0: i32, %arg1: memref<16x16xf32, #tpu.memory_space<vmem>>, %arg2: memref<16x2xf32, #tpu.memory_space<vmem>>, %arg3: memref<2x16xf32, #tpu.memory_space<vmem>>, %arg4: memref<16x16xf32, #tpu.memory_space<vmem>>) attributes {dimension_semantics = [#tpu.dimension_semantics<parallel>], iteration_bounds = array<i64: 1>, scalar_prefetch = 0 : i64, scratch_operands = 0 : i64, tpu.core_type = #tpu.core_type<tc>, window_params = [{transform_indices = @transform_0, window_bounds = array<i64: 16, 16>}, {transform_indices = @transform_1, window_bounds = array<i64: 16, 2>}, {pipeline_mode = #tpu.pipeline_mode<synchronous>, transform_indices = @transform_2, window_bounds = array<i64: 2, 16>}, {transform_indices = @transform_3, window_bounds = array<i64: 16, 16>}]} {
    %c0 = arith.constant 0 : index
    %c0_0 = arith.constant 0 : index
    %0 = vector.load %arg2[%c0, %c0_0] : memref<16x2xf32, #tpu.memory_space<vmem>>, vector<16x2xf32>
    %cst = arith.constant 0.000000e+00 : f32
    %1 = vector.broadcast %cst : f32 to vector<16x2xf32>
    %2 = arith.cmpf oeq, %0, %1 : vector<16x2xf32>
    %cst_1 = arith.constant 9.99999996E-13 : f32
    %3 = vector.broadcast %cst_1 : f32 to vector<16x2xf32>
    %4 = arith.select %2, %3, %0 : vector<16x2xi1>, vector<16x2xf32>
    %c0_2 = arith.constant 0 : index
    %c0_3 = arith.constant 0 : index
    %5 = vector.load %arg3[%c0_2, %c0_3] : memref<2x16xf32, #tpu.memory_space<vmem>>, vector<2x16xf32>
    %cst_4 = arith.constant dense<0.000000e+00> : vector<16x16xf32>
    %6 = tpu.matmul %4, %5, %cst_4 {dimension_numbers = #tpu.dot_dimension_numbers<[1], [0], [0], [1], [0, 0, 1, 1], [], []>} : vector<16x2xf32>, vector<2x16xf32>, vector<16x16xf32> -> vector<16x16xf32>
    %c0_5 = arith.constant 0 : index
    %c0_6 = arith.constant 0 : index
    %7 = vector.load %arg1[%c0_5, %c0_6] : memref<16x16xf32, #tpu.memory_space<vmem>>, vector<16x16xf32>
    %8 = tpu.reciprocal %6 {approx = true} : vector<16x16xf32> -> vector<16x16xf32>
    %9 = arith.mulf %7, %8 : vector<16x16xf32>
    %cst_7 = arith.constant 0.000000e+00 : f32
    %10 = vector.broadcast %cst_7 : f32 to vector<16x16xf32>
    %11 = arith.cmpf ogt, %9, %10 : vector<16x16xf32>
    %12 = math.exp %9 : vector<16x16xf32>
    %cst_8 = arith.constant 1.000000e+00 : f32
    %13 = vector.broadcast %cst_8 : f32 to vector<16x16xf32>
    %14 = arith.subf %12, %13 : vector<16x16xf32>
    %15 = arith.select %11, %9, %14 : vector<16x16xi1>, vector<16x16xf32>
    %c0_9 = arith.constant 0 : index
    %c0_10 = arith.constant 0 : index
    %16 = vector.load %arg4[%c0_9, %c0_10] : memref<16x16xf32, #tpu.memory_space<vmem>>, vector<16x16xf32>
    tpu.vector_store %arg4[%c0_9, %c0_10], %15 {strides = array<i32>} : memref<16x16xf32, #tpu.memory_space<vmem>>, vector<16x16xf32>,
    return
  }
  func.func @transform_0(%arg0: i32) -> (i32, i32) {
    %c0_i32 = arith.constant 0 : i32
    %c0_i32_0 = arith.constant 0 : i32
    return %arg0, %c0_i32 : i32, i32
  }
  func.func @transform_1(%arg0: i32) -> (i32, i32) {
    %c0_i32 = arith.constant 0 : i32
    %c0_i32_0 = arith.constant 0 : i32
    return %arg0, %c0_i32 : i32, i32
  }
  func.func @transform_2(%arg0: i32) -> (i32, i32) {
    %c0_i32 = arith.constant 0 : i32
    %c0_i32_0 = arith.constant 0 : i32
    %c0_i32_1 = arith.constant 0 : i32
    return %c0_i32, %c0_i32_0 : i32, i32
  }
  func.func @transform_3(%arg0: i32) -> (i32, i32) {
    %c0_i32 = arith.constant 0 : i32
    %c0_i32_0 = arith.constant 0 : i32
    return %arg0, %c0_i32 : i32, i32
  }
}

module attributes {stable_mosaic.version = 11 : i64} {
  func.func @_gat_edge_kernel(%arg0: i32, %arg1: memref<12x16xf32, #tpu.memory_space<vmem>>, %arg2: memref<12x16xf32, #tpu.memory_space<vmem>>, %arg3: memref<12x8xf32, #tpu.memory_space<vmem>>, %arg4: memref<16x16xf32, #tpu.memory_space<vmem>>, %arg5: memref<16x16xf32, #tpu.memory_space<vmem>>, %arg6: memref<8x16xf32, #tpu.memory_space<vmem>>, %arg7: memref<16x1xf32, #tpu.memory_space<vmem>>, %arg8: memref<1x16xf32, #tpu.memory_space<vmem>>, %arg9: memref<12x16xf32, #tpu.memory_space<vmem>>, %arg10: memref<12x1xf32, #tpu.memory_space<vmem>>) attributes {dimension_semantics = [#tpu.dimension_semantics<parallel>], iteration_bounds = array<i64: 1>, scalar_prefetch = 0 : i64, scratch_operands = 0 : i64, tpu.core_type = #tpu.core_type<tc>, window_params = [{transform_indices = @transform_0, window_bounds = array<i64: 12, 16>}, {transform_indices = @transform_1, window_bounds = array<i64: 12, 16>}, {transform_indices = @transform_2, window_bounds = array<i64: 12, 8>}, {pipeline_mode = #tpu.pipeline_mode<synchronous>, transform_indices = @transform_3, window_bounds = array<i64: 16, 16>}, {pipeline_mode = #tpu.pipeline_mode<synchronous>, transform_indices = @transform_4, window_bounds = array<i64: 16, 16>}, {pipeline_mode = #tpu.pipeline_mode<synchronous>, transform_indices = @transform_5, window_bounds = array<i64: 8, 16>}, {pipeline_mode = #tpu.pipeline_mode<synchronous>, transform_indices = @transform_6, window_bounds = array<i64: 16, 1>}, {pipeline_mode = #tpu.pipeline_mode<synchronous>, transform_indices = @transform_7, window_bounds = array<i64: 1, 16>}, {transform_indices = @transform_8, window_bounds = array<i64: 12, 16>}, {transform_indices = @transform_9, window_bounds = array<i64: 12, 1>}]} {
    %c0 = arith.constant 0 : index
    %c0_0 = arith.constant 0 : index
    %0 = vector.load %arg1[%c0, %c0_0] : memref<12x16xf32, #tpu.memory_space<vmem>>, vector<12x16xf32>
    %c0_1 = arith.constant 0 : index
    %c0_2 = arith.constant 0 : index
    %1 = vector.load %arg4[%c0_1, %c0_2] : memref<16x16xf32, #tpu.memory_space<vmem>>, vector<16x16xf32>
    %cst = arith.constant dense<0.000000e+00> : vector<12x16xf32>
    %2 = tpu.matmul %0, %1, %cst {dimension_numbers = #tpu.dot_dimension_numbers<[1], [0], [0], [1], [0, 0, 1, 1], [], []>} : vector<12x16xf32>, vector<16x16xf32>, vector<12x16xf32> -> vector<12x16xf32>
    %c0_3 = arith.constant 0 : index
    %c0_4 = arith.constant 0 : index
    %3 = vector.load %arg2[%c0_3, %c0_4] : memref<12x16xf32, #tpu.memory_space<vmem>>, vector<12x16xf32>
    %c0_5 = arith.constant 0 : index
    %c0_6 = arith.constant 0 : index
    %4 = vector.load %arg5[%c0_5, %c0_6] : memref<16x16xf32, #tpu.memory_space<vmem>>, vector<16x16xf32>
    %cst_7 = arith.constant dense<0.000000e+00> : vector<12x16xf32>
    %5 = tpu.matmul %3, %4, %cst_7 {dimension_numbers = #tpu.dot_dimension_numbers<[1], [0], [0], [1], [0, 0, 1, 1], [], []>} : vector<12x16xf32>, vector<16x16xf32>, vector<12x16xf32> -> vector<12x16xf32>
    %6 = arith.addf %2, %5 : vector<12x16xf32>
    %c0_8 = arith.constant 0 : index
    %c0_9 = arith.constant 0 : index
    %7 = vector.load %arg3[%c0_8, %c0_9] : memref<12x8xf32, #tpu.memory_space<vmem>>, vector<12x8xf32>
    %c0_10 = arith.constant 0 : index
    %c0_11 = arith.constant 0 : index
    %8 = vector.load %arg6[%c0_10, %c0_11] : memref<8x16xf32, #tpu.memory_space<vmem>>, vector<8x16xf32>
    %cst_12 = arith.constant dense<0.000000e+00> : vector<12x16xf32>
    %9 = tpu.matmul %7, %8, %cst_12 {dimension_numbers = #tpu.dot_dimension_numbers<[1], [0], [0], [1], [0, 0, 1, 1], [], []>} : vector<12x8xf32>, vector<8x16xf32>, vector<12x16xf32> -> vector<12x16xf32>
    %10 = arith.addf %6, %9 : vector<12x16xf32>
    %c0_13 = arith.constant 0 : index
    %c0_14 = arith.constant 0 : index
    %11 = vector.load %arg7[%c0_13, %c0_14] : memref<16x1xf32, #tpu.memory_space<vmem>>, vector<16x1xf32>
    %cst_15 = arith.constant dense<0.000000e+00> : vector<12x1xf32>
    %12 = tpu.matmul %10, %11, %cst_15 {dimension_numbers = #tpu.dot_dimension_numbers<[1], [0], [0], [1], [0, 0, 1, 1], [], []>} : vector<12x16xf32>, vector<16x1xf32>, vector<12x1xf32> -> vector<12x1xf32>
    %cst_16 = arith.constant 0.000000e+00 : f32
    %13 = vector.broadcast %cst_16 : f32 to vector<12x1xf32>
    %14 = arith.cmpf ogt, %12, %13 : vector<12x1xf32>
    %cst_17 = arith.constant 2.000000e-01 : f32
    %15 = vector.broadcast %cst_17 : f32 to vector<12x1xf32>
    %16 = arith.mulf %15, %12 : vector<12x1xf32>
    %17 = arith.select %14, %12, %16 : vector<12x1xi1>, vector<12x1xf32>
    %cst_18 = arith.constant 0.000000e+00 : f32
    %18 = vector.broadcast %cst_18 : f32 to vector<12x1xf32>
    %19 = arith.subf %18, %17 : vector<12x1xf32>
    %20 = math.exp %19 : vector<12x1xf32>
    %c0_19 = arith.constant 0 : index
    %c0_20 = arith.constant 0 : index
    %21 = vector.load %arg10[%c0_19, %c0_20] : memref<12x1xf32, #tpu.memory_space<vmem>>, vector<12x1xf32>
    tpu.vector_store %arg10[%c0_19, %c0_20], %20 {strides = array<i32>} : memref<12x1xf32, #tpu.memory_space<vmem>>, vector<12x1xf32>,
    %c0_21 = arith.constant 0 : index
    %c0_22 = arith.constant 0 : index
    %22 = vector.load %arg8[%c0_21, %c0_22] : memref<1x16xf32, #tpu.memory_space<vmem>>, vector<1x16xf32>
    %cst_23 = arith.constant dense<0.000000e+00> : vector<12x16xf32>
    %23 = tpu.matmul %20, %22, %cst_23 {dimension_numbers = #tpu.dot_dimension_numbers<[1], [0], [0], [1], [0, 0, 1, 1], [], []>} : vector<12x1xf32>, vector<1x16xf32>, vector<12x16xf32> -> vector<12x16xf32>
    %24 = arith.mulf %23, %10 : vector<12x16xf32>
    %c0_24 = arith.constant 0 : index
    %c0_25 = arith.constant 0 : index
    %25 = vector.load %arg9[%c0_24, %c0_25] : memref<12x16xf32, #tpu.memory_space<vmem>>, vector<12x16xf32>
    tpu.vector_store %arg9[%c0_24, %c0_25], %24 {strides = array<i32>} : memref<12x16xf32, #tpu.memory_space<vmem>>, vector<12x16xf32>,
    return
  }
  func.func @transform_0(%arg0: i32) -> (i32, i32) {
    %c0_i32 = arith.constant 0 : i32
    %c0_i32_0 = arith.constant 0 : i32
    return %arg0, %c0_i32 : i32, i32
  }
  func.func @transform_1(%arg0: i32) -> (i32, i32) {
    %c0_i32 = arith.constant 0 : i32
    %c0_i32_0 = arith.constant 0 : i32
    return %arg0, %c0_i32 : i32, i32
  }
  func.func @transform_2(%arg0: i32) -> (i32, i32) {
    %c0_i32 = arith.constant 0 : i32
    %c0_i32_0 = arith.constant 0 : i32
    return %arg0, %c0_i32 : i32, i32
  }
  func.func @transform_3(%arg0: i32) -> (i32, i32) {
    %c0_i32 = arith.constant 0 : i32
    %c0_i32_0 = arith.constant 0 : i32
    %c0_i32_1 = arith.constant 0 : i32
    return %c0_i32, %c0_i32_0 : i32, i32
  }
  func.func @transform_4(%arg0: i32) -> (i32, i32) {
    %c0_i32 = arith.constant 0 : i32
    %c0_i32_0 = arith.constant 0 : i32
    %c0_i32_1 = arith.constant 0 : i32
    return %c0_i32, %c0_i32_0 : i32, i32
  }
  func.func @transform_5(%arg0: i32) -> (i32, i32) {
    %c0_i32 = arith.constant 0 : i32
    %c0_i32_0 = arith.constant 0 : i32
    %c0_i32_1 = arith.constant 0 : i32
    return %c0_i32, %c0_i32_0 : i32, i32
  }
  func.func @transform_6(%arg0: i32) -> (i32, i32) {
    %c0_i32 = arith.constant 0 : i32
    %c0_i32_0 = arith.constant 0 : i32
    %c0_i32_1 = arith.constant 0 : i32
    return %c0_i32, %c0_i32_0 : i32, i32
  }
  func.func @transform_7(%arg0: i32) -> (i32, i32) {
    %c0_i32 = arith.constant 0 : i32
    %c0_i32_0 = arith.constant 0 : i32
    %c0_i32_1 = arith.constant 0 : i32
    return %c0_i32, %c0_i32_0 : i32, i32
  }
  func.func @transform_8(%arg0: i32) -> (i32, i32) {
    %c0_i32 = arith.constant 0 : i32
    %c0_i32_0 = arith.constant 0 : i32
    return %arg0, %c0_i32 : i32, i32
  }
  func.func @transform_9(%arg0: i32) -> (i32, i32) {
    %c0_i32 = arith.constant 0 : i32
    %c0_i32_0 = arith.constant 0 : i32
    return %arg0, %c0_i32 : i32, i32
  }
}

module attributes {stable_mosaic.version = 11 : i64} {
  func.func @_gat_finalize_kernel(%arg0: i32, %arg1: memref<16x16xf32, #tpu.memory_space<vmem>>, %arg2: memref<16x1xf32, #tpu.memory_space<vmem>>, %arg3: memref<1x16xf32, #tpu.memory_space<vmem>>, %arg4: memref<16x16xf32, #tpu.memory_space<vmem>>) attributes {dimension_semantics = [#tpu.dimension_semantics<parallel>], iteration_bounds = array<i64: 1>, scalar_prefetch = 0 : i64, scratch_operands = 0 : i64, tpu.core_type = #tpu.core_type<tc>, window_params = [{transform_indices = @transform_0, window_bounds = array<i64: 16, 16>}, {transform_indices = @transform_1, window_bounds = array<i64: 16, 1>}, {pipeline_mode = #tpu.pipeline_mode<synchronous>, transform_indices = @transform_2, window_bounds = array<i64: 1, 16>}, {transform_indices = @transform_3, window_bounds = array<i64: 16, 16>}]} {
    %c0 = arith.constant 0 : index
    %c0_0 = arith.constant 0 : index
    %0 = vector.load %arg2[%c0, %c0_0] : memref<16x1xf32, #tpu.memory_space<vmem>>, vector<16x1xf32>
    %cst = arith.constant 0.000000e+00 : f32
    %1 = vector.broadcast %cst : f32 to vector<16x1xf32>
    %2 = arith.cmpf oeq, %0, %1 : vector<16x1xf32>
    %cst_1 = arith.constant 9.99999996E-13 : f32
    %3 = vector.broadcast %cst_1 : f32 to vector<16x1xf32>
    %4 = arith.select %2, %3, %0 : vector<16x1xi1>, vector<16x1xf32>
    %c0_2 = arith.constant 0 : index
    %c0_3 = arith.constant 0 : index
    %5 = vector.load %arg3[%c0_2, %c0_3] : memref<1x16xf32, #tpu.memory_space<vmem>>, vector<1x16xf32>
    %cst_4 = arith.constant dense<0.000000e+00> : vector<16x16xf32>
    %6 = tpu.matmul %4, %5, %cst_4 {dimension_numbers = #tpu.dot_dimension_numbers<[1], [0], [0], [1], [0, 0, 1, 1], [], []>} : vector<16x1xf32>, vector<1x16xf32>, vector<16x16xf32> -> vector<16x16xf32>
    %c0_5 = arith.constant 0 : index
    %c0_6 = arith.constant 0 : index
    %7 = vector.load %arg1[%c0_5, %c0_6] : memref<16x16xf32, #tpu.memory_space<vmem>>, vector<16x16xf32>
    %8 = tpu.reciprocal %6 {approx = true} : vector<16x16xf32> -> vector<16x16xf32>
    %9 = arith.mulf %7, %8 : vector<16x16xf32>
    %cst_7 = arith.constant 0.000000e+00 : f32
    %10 = vector.broadcast %cst_7 : f32 to vector<16x16xf32>
    %11 = arith.cmpf ogt, %9, %10 : vector<16x16xf32>
    %12 = math.exp %9 : vector<16x16xf32>
    %cst_8 = arith.constant 1.000000e+00 : f32
    %13 = vector.broadcast %cst_8 : f32 to vector<16x16xf32>
    %14 = arith.subf %12, %13 : vector<16x16xf32>
    %15 = arith.select %11, %9, %14 : vector<16x16xi1>, vector<16x16xf32>
    %c0_9 = arith.constant 0 : index
    %c0_10 = arith.constant 0 : index
    %16 = vector.load %arg4[%c0_9, %c0_10] : memref<16x16xf32, #tpu.memory_space<vmem>>, vector<16x16xf32>
    tpu.vector_store %arg4[%c0_9, %c0_10], %15 {strides = array<i32>} : memref<16x16xf32, #tpu.memory_space<vmem>>, vector<16x16xf32>,
    return
  }
  func.func @transform_0(%arg0: i32) -> (i32, i32) {
    %c0_i32 = arith.constant 0 : i32
    %c0_i32_0 = arith.constant 0 : i32
    return %arg0, %c0_i32 : i32, i32
  }
  func.func @transform_1(%arg0: i32) -> (i32, i32) {
    %c0_i32 = arith.constant 0 : i32
    %c0_i32_0 = arith.constant 0 : i32
    return %arg0, %c0_i32 : i32, i32
  }
  func.func @transform_2(%arg0: i32) -> (i32, i32) {
    %c0_i32 = arith.constant 0 : i32
    %c0_i32_0 = arith.constant 0 : i32
    %c0_i32_1 = arith.constant 0 : i32
    return %c0_i32, %c0_i32_0 : i32, i32
  }
  func.func @transform_3(%arg0: i32) -> (i32, i32) {
    %c0_i32 = arith.constant 0 : i32
    %c0_i32_0 = arith.constant 0 : i32
    return %arg0, %c0_i32 : i32, i32
  }
}

module attributes {stable_mosaic.version = 11 : i64} {
  func.func @_time_embed_kernel(%arg0: i32, %arg1: memref<4x1xf32, #tpu.memory_space<vmem>>, %arg2: memref<1x8xf32, #tpu.memory_space<vmem>>, %arg3: memref<1x8xf32, #tpu.memory_space<vmem>>, %arg4: memref<4x8xf32, #tpu.memory_space<vmem>>) attributes {dimension_semantics = [#tpu.dimension_semantics<parallel>], iteration_bounds = array<i64: 1>, scalar_prefetch = 0 : i64, scratch_operands = 0 : i64, tpu.core_type = #tpu.core_type<tc>, window_params = [{transform_indices = @transform_0, window_bounds = array<i64: 4, 1>}, {pipeline_mode = #tpu.pipeline_mode<synchronous>, transform_indices = @transform_1, window_bounds = array<i64: 1, 8>}, {pipeline_mode = #tpu.pipeline_mode<synchronous>, transform_indices = @transform_2, window_bounds = array<i64: 1, 8>}, {transform_indices = @transform_3, window_bounds = array<i64: 4, 8>}]} {
    %c0 = arith.constant 0 : index
    %c0_0 = arith.constant 0 : index
    %0 = vector.load %arg1[%c0, %c0_0] : memref<4x1xf32, #tpu.memory_space<vmem>>, vector<4x1xf32>
    %c0_1 = arith.constant 0 : index
    %c0_2 = arith.constant 0 : index
    %1 = vector.load %arg2[%c0_1, %c0_2] : memref<1x8xf32, #tpu.memory_space<vmem>>, vector<1x8xf32>
    %2 = vector.broadcast %0 : vector<4x1xf32> to vector<4x8xf32>
    %3 = vector.broadcast %1 : vector<1x8xf32> to vector<4x8xf32>
    %4 = arith.mulf %2, %3 : vector<4x8xf32>
    %c0_3 = arith.constant 0 : index
    %c0_4 = arith.constant 0 : index
    %5 = vector.load %arg3[%c0_3, %c0_4] : memref<1x8xf32, #tpu.memory_space<vmem>>, vector<1x8xf32>
    %6 = vector.broadcast %5 : vector<1x8xf32> to vector<4x8xf32>
    %7 = arith.addf %4, %6 : vector<4x8xf32>
    %8 = math.cos %7 : vector<4x8xf32>
    %c0_5 = arith.constant 0 : index
    %c0_6 = arith.constant 0 : index
    %9 = vector.load %arg4[%c0_5, %c0_6] : memref<4x8xf32, #tpu.memory_space<vmem>>, vector<4x8xf32>
    tpu.vector_store %arg4[%c0_5, %c0_6], %8 {strides = array<i32>} : memref<4x8xf32, #tpu.memory_space<vmem>>, vector<4x8xf32>,
    return
  }
  func.func @transform_0(%arg0: i32) -> (i32, i32) {
    %c0_i32 = arith.constant 0 : i32
    %c0_i32_0 = arith.constant 0 : i32
    return %arg0, %c0_i32 : i32, i32
  }
  func.func @transform_1(%arg0: i32) -> (i32, i32) {
    %c0_i32 = arith.constant 0 : i32
    %c0_i32_0 = arith.constant 0 : i32
    %c0_i32_1 = arith.constant 0 : i32
    return %c0_i32, %c0_i32_0 : i32, i32
  }
  func.func @transform_2(%arg0: i32) -> (i32, i32) {
    %c0_i32 = arith.constant 0 : i32
    %c0_i32_0 = arith.constant 0 : i32
    %c0_i32_1 = arith.constant 0 : i32
    return %c0_i32, %c0_i32_0 : i32, i32
  }
  func.func @transform_3(%arg0: i32) -> (i32, i32) {
    %c0_i32 = arith.constant 0 : i32
    %c0_i32_0 = arith.constant 0 : i32
    return %arg0, %c0_i32 : i32, i32
  }
}

module attributes {stable_mosaic.version = 11 : i64} {
  func.func @_entity_fuse_kernel(%arg0: i32, %arg1: memref<16x8xf32, #tpu.memory_space<vmem>>, %arg2: memref<8x16xf32, #tpu.memory_space<vmem>>, %arg3: memref<16x16xf32, #tpu.memory_space<vmem>>, %arg4: memref<16x1xf32, #tpu.memory_space<vmem>>, %arg5: memref<16x16xf32, #tpu.memory_space<vmem>>) attributes {dimension_semantics = [#tpu.dimension_semantics<parallel>], iteration_bounds = array<i64: 1>, scalar_prefetch = 0 : i64, scratch_operands = 0 : i64, tpu.core_type = #tpu.core_type<tc>, window_params = [{transform_indices = @transform_0, window_bounds = array<i64: 16, 8>}, {pipeline_mode = #tpu.pipeline_mode<synchronous>, transform_indices = @transform_1, window_bounds = array<i64: 8, 16>}, {transform_indices = @transform_2, window_bounds = array<i64: 16, 16>}, {transform_indices = @transform_3, window_bounds = array<i64: 16, 1>}, {transform_indices = @transform_4, window_bounds = array<i64: 16, 16>}]} {
    %c0 = arith.constant 0 : index
    %c0_0 = arith.constant 0 : index
    %0 = vector.load %arg1[%c0, %c0_0] : memref<16x8xf32, #tpu.memory_space<vmem>>, vector<16x8xf32>
    %1 = arith.mulf %0, %0 : vector<16x8xf32>
    %cst = arith.constant dense<0.000000e+00> : vector<16xf32>
    %2 = vector.multi_reduction <add>, %1, %cst [1] : vector<16x8xf32> to vector<16xf32>
    %3 = vector.shape_cast %2 : vector<16xf32> to vector<16x1xf32>
    %cst_1 = arith.constant 1.000000e-24 : f32
    %4 = vector.broadcast %cst_1 : f32 to vector<16x1xf32>
    %5 = arith.maximumf %3, %4 : vector<16x1xf32>
    %6 = math.rsqrt %5 : vector<16x1xf32>
    %7 = vector.broadcast %6 : vector<16x1xf32> to vector<16x8xf32>
    %8 = arith.mulf %0, %7 : vector<16x8xf32>
    %c0_2 = arith.constant 0 : index
    %c0_3 = arith.constant 0 : index
    %9 = vector.load %arg2[%c0_2, %c0_3] : memref<8x16xf32, #tpu.memory_space<vmem>>, vector<8x16xf32>
    %cst_4 = arith.constant dense<0.000000e+00> : vector<16x16xf32>
    %10 = tpu.matmul %8, %9, %cst_4 {dimension_numbers = #tpu.dot_dimension_numbers<[1], [0], [0], [1], [0, 0, 1, 1], [], []>} : vector<16x8xf32>, vector<8x16xf32>, vector<16x16xf32> -> vector<16x16xf32>
    %c0_5 = arith.constant 0 : index
    %c0_6 = arith.constant 0 : index
    %11 = vector.load %arg4[%c0_5, %c0_6] : memref<16x1xf32, #tpu.memory_space<vmem>>, vector<16x1xf32>
    %c0_7 = arith.constant 0 : index
    %c0_8 = arith.constant 0 : index
    %12 = vector.load %arg3[%c0_7, %c0_8] : memref<16x16xf32, #tpu.memory_space<vmem>>, vector<16x16xf32>
    %13 = vector.broadcast %11 : vector<16x1xf32> to vector<16x16xf32>
    %14 = arith.mulf %13, %12 : vector<16x16xf32>
    %15 = arith.addf %10, %14 : vector<16x16xf32>
    %16 = arith.mulf %15, %15 : vector<16x16xf32>
    %cst_9 = arith.constant dense<0.000000e+00> : vector<16xf32>
    %17 = vector.multi_reduction <add>, %16, %cst_9 [1] : vector<16x16xf32> to vector<16xf32>
    %18 = vector.shape_cast %17 : vector<16xf32> to vector<16x1xf32>
    %cst_10 = arith.constant 1.000000e-24 : f32
    %19 = vector.broadcast %cst_10 : f32 to vector<16x1xf32>
    %20 = arith.maximumf %18, %19 : vector<16x1xf32>
    %21 = math.rsqrt %20 : vector<16x1xf32>
    %22 = vector.broadcast %21 : vector<16x1xf32> to vector<16x16xf32>
    %23 = arith.mulf %15, %22 : vector<16x16xf32>
    %c0_11 = arith.constant 0 : index
    %c0_12 = arith.constant 0 : index
    %24 = vector.load %arg5[%c0_11, %c0_12] : memref<16x16xf32, #tpu.memory_space<vmem>>, vector<16x16xf32>
    tpu.vector_store %arg5[%c0_11, %c0_12], %23 {strides = array<i32>} : memref<16x16xf32, #tpu.memory_space<vmem>>, vector<16x16xf32>,
    return
  }
  func.func @transform_0(%arg0: i32) -> (i32, i32) {
    %c0_i32 = arith.constant 0 : i32
    %c0_i32_0 = arith.constant 0 : i32
    return %arg0, %c0_i32 : i32, i32
  }
  func.func @transform_1(%arg0: i32) -> (i32, i32) {
    %c0_i32 = arith.constant 0 : i32
    %c0_i32_0 = arith.constant 0 : i32
    %c0_i32_1 = arith.constant 0 : i32
    return %c0_i32, %c0_i32_0 : i32, i32
  }
  func.func @transform_2(%arg0: i32) -> (i32, i32) {
    %c0_i32 = arith.constant 0 : i32
    %c0_i32_0 = arith.constant 0 : i32
    return %arg0, %c0_i32 : i32, i32
  }
  func.func @transform_3(%arg0: i32) -> (i32, i32) {
    %c0_i32 = arith.constant 0 : i32
    %c0_i32_0 = arith.constant 0 : i32
    return %arg0, %c0_i32 : i32, i32
  }
  func.func @transform_4(%arg0: i32) -> (i32, i32) {
    %c0_i32 = arith.constant 0 : i32
    %c0_i32_0 = arith.constant 0 : i32
    return %arg0, %c0_i32 : i32, i32
  }
}

</mosaic_0001>

<llo_original>
// kernel: k_half_forward.7
$region0: #{k_half_forward.7}
  #allocation0 [shape = 'u32[]', space=smem, size = 0x4, offset = 0x4, fixed_abs, tag = 'smem constant byte address 0x4 - core index']
  #allocation1 [shape = 'u32[144,128]{1,0:T(1,128)}', space=vmem, size = 0x12000, scoped, tag = 'internal scratch']
  %s0 = inlined_call_operand.vmem [shape: f32[16,16], index: 0, kind: input, shape index: {}]
  %s1 = inlined_call_operand.vmem [shape: f32[16,2], index: 1, kind: input, shape index: {}]
  %s2 = inlined_call_operand.vmem [shape: f32[2,16], index: 2, kind: input, shape index: {}]
  %s3 = inlined_call_operand.vmem [shape: f32[16,16], index: 3, kind: output, shape index: {}]
  %s4 = sld [smem:[#allocation0]]
  $region22: #{k_half_forward.7} parent=0
    _
  %s6 = ssub.s32 1, %s4
  %s7 = scalar_select 0, %s6, %s4
  // Predicated region
  $region2: #{k_half_forward.7} parent=0 // pred_check
    _
  $region3: #{k_half_forward.7} parent=0 // pred_check_branch
    %9 = sbr.rel (0) target = $region5
  $region4: #{k_half_forward.7} parent=0 // pred_region
    _
  $region5: #{k_half_forward.7} parent=0 // pred_fallthru
    _
  // Predicated region
  $region6: #{k_half_forward.7} parent=0 // pred_check
    _
  $region7: #{k_half_forward.7} parent=0 // pred_check_branch
    %11 = sbr.rel (0) target = $region9
  $region8: #{k_half_forward.7} parent=0 // pred_region
    _
  $region9: #{k_half_forward.7} parent=0 // pred_fallthru
    _
  // Predicated region
  $region10: #{k_half_forward.7} parent=0 // pred_check
    _
  $region11: #{k_half_forward.7} parent=0 // pred_check_branch
    %13 = sbr.rel (0) target = $region13
  $region12: #{k_half_forward.7} parent=0 // pred_region
    _
  $region13: #{k_half_forward.7} parent=0 // pred_fallthru
    _
  %v14 = vld [vmem:[%s1] sm:$0xff]
  %v15 = vld [vmem:[%s1 + $0x8] sm:$0xff]
  %vm16 = vcmp.eq.f32.partialorder %v14, 0.0
  %vm17 = vcmp.eq.f32.partialorder %v15, 0.0
  %v18 = vsel %vm16, 1e-12, %v14
  %v19 = vsel %vm17, 1e-12, %v15
  %v20 = vld [vmem:[%s2] sm:$0x3]
  %vm21 = vcmask 15360
  %v23 = vsel %vm21, %v18, 0
  %v26 = vsel %vm21, %v19, 0
  %vm28 = vcmask 1041408
  %v30 = vsel %vm28, %v20, 0
  %32 = vmatprep.subr.mxu0 0.0
  %33 = vmatpush1.msra.mxu0 0.0
  %34 = vmatprep.subr.mxu0 0.0
  %35 = vmatpush1.msra.mxu0 0.0
  %36 = vmatprep.subr.mxu0 0.0
  %37 = vmatpush1.msra.mxu0 0.0
  %38 = vmatprep.subr.mxu0 0.0
  %39 = vmatpush1.msra.mxu0 0.0
  %40 = vmatprep.subr.mxu0 0.0
  %41 = vmatpush1.msra.mxu0 0.0
  %42 = vmatprep.subr.mxu0 0.0
  %43 = vmatpush1.msra.mxu0 0.0
  %44 = vmatprep.subr.mxu0 0.0
  %45 = vmatpush1.msra.mxu0 0.0
  %46 = vmatprep.subr.mxu0 0.0
  %47 = vmatpush1.msra.mxu0 0.0
  %48 = vmatprep.subr.mxu0 0.0
  %49 = vmatpush1.msra.mxu0 0.0
  %50 = vmatprep.subr.mxu0 0.0
  %51 = vmatpush1.msra.mxu0 0.0
  %52 = vmatprep.subr.mxu0 0.0
  %53 = vmatpush1.msra.mxu0 0.0
  %54 = vmatprep.subr.mxu0 0.0
  %55 = vmatpush1.msra.mxu0 0.0
  %56 = vmatprep.subr.mxu0 0.0
  %57 = vmatpush1.msra.mxu0 0.0
  %58 = vmatprep.subr.mxu0 0.0
  %59 = vmatpush1.msra.mxu0 0.0
  %60 = vmatprep.subr.mxu0 0.0
  %61 = vmatpush1.msra.mxu0 0.0
  %62 = vmatprep.subr.mxu0 0.0
  %63 = vmatpush1.msra.mxu0 %v30
  %64 = vmatprep.subr.mxu0 0.0
  %65 = vmatpush2.msra.mxu0 0.0
  %66 = vmatprep.subr.mxu0 0.0
  %67 = vmatpush2.msra.mxu0 0.0
  %68 = vmatprep.subr.mxu0 0.0
  %69 = vmatpush2.msra.mxu0 0.0
  %70 = vmatprep.subr.mxu0 0.0
  %71 = vmatpush2.msra.mxu0 0.0
  %72 = vmatprep.subr.mxu0 0.0
  %73 = vmatpush2.msra.mxu0 0.0
  %74 = vmatprep.subr.mxu0 0.0
  %75 = vmatpush2.msra.mxu0 0.0
  %76 = vmatprep.subr.mxu0 0.0
  %77 = vmatpush2.msra.mxu0 0.0
  %78 = vmatprep.subr.mxu0 0.0
  %79 = vmatpush2.msra.mxu0 0.0
  %80 = vmatprep.subr.mxu0 0.0
  %81 = vmatpush2.msra.mxu0 0.0
  %82 = vmatprep.subr.mxu0 0.0
  %83 = vmatpush2.msra.mxu0 0.0
  %84 = vmatprep.subr.mxu0 0.0
  %85 = vmatpush2.msra.mxu0 0.0
  %86 = vmatprep.subr.mxu0 0.0
  %87 = vmatpush2.msra.mxu0 0.0
  %88 = vmatprep.subr.mxu0 0.0
  %89 = vmatpush2.msra.mxu0 0.0
  %90 = vmatprep.subr.mxu0 0.0
  %91 = vmatpush2.msra.mxu0 0.0
  %92 = vmatprep.subr.mxu0 0.0
  %93 = vmatpush2.msra.mxu0 0.0
  %94 = vmatprep.subr.mxu0 0.0
  %95 = vmatpush2.msra.mxu0 0.0
  %96 = vmatprep.mubr.f32.mxu0 0.0
  %97 = vmatmul.mubr.f32.gmra.mxu0 %v23
  %v98 = vpop.f32.mrf.mxu0
  %v99 = vadd.f32 0.0, %v98
  %v100 = vpop.f32.mrf.mxu0
  %101 = vmatprep.mubr.f32.mxu0 0.0
  %102 = vmatmul.mubr.f32.gmra.mxu0 %v26
  %v103 = vpop.f32.mrf.mxu0
  %v104 = vadd.f32 0.0, %v103
  %v105 = vpop.f32.mrf.mxu0
  %106 = vdwg.mxu0
  %v107 = vld [vmem:[%s0] sm:$0xff]
  %v108 = vld [vmem:[%s0 + $0x8] sm:$0xff]
  %v109 = vrcp.pop %v99
  %v110 = vrcp.pop %v104
  %v111 = vmul.f32 %v107, %v109
  %v112 = vmul.f32 %v108, %v110
  %vm113 = vcmp.gt.f32.partialorder %v111, 0.0
  %vm114 = vcmp.gt.f32.partialorder %v112, 0.0
  %v115 = vmul.f32 %v111, 1.442695
  %v116 = vpow.pop %v115
  %v117 = vmul.f32 %v112, 1.442695
  %v118 = vpow.pop %v117
  %v119 = vsub.f32 %v116, 1.0
  %v120 = vsub.f32 %v118, 1.0
  %v121 = vsel %vm113, %v111, %v119
  %v122 = vsel %vm114, %v112, %v120
  %vm123 = vcmask 130048
  %124 = vst.msk [vmem:[%s3] sm:$0xff] %vm123, %v121
  %125 = vst.msk [vmem:[%s3 + $0x8] sm:$0xff] %vm123, %v122
  // Predicated region
  $region14: #{k_half_forward.7} parent=0 // pred_check
    _
  $region15: #{k_half_forward.7} parent=0 // pred_check_branch
    %127 = sbr.rel (0) target = $region17
  $region16: #{k_half_forward.7} parent=0 // pred_region
    _
  $region17: #{k_half_forward.7} parent=0 // pred_fallthru
    _
  // Predicated region
  $region18: #{k_half_forward.7} parent=0 // pred_check
    _
  $region19: #{k_half_forward.7} parent=0 // pred_check_branch
    %129 = sbr.rel (0) target = $region21
  $region20: #{k_half_forward.7} parent=0 // pred_region
    _
  $region21: #{k_half_forward.7} parent=0 // pred_fallthru
    _

// kernel: k_half_forward.6
$region0: #{k_half_forward.6}
  #allocation0 [shape = 'u32[]', space=smem, size = 0x4, offset = 0x4, fixed_abs, tag = 'smem constant byte address 0x4 - core index']
  #allocation1 [shape = 'u32[144,128]{1,0:T(1,128)}', space=vmem, size = 0x12000, scoped, tag = 'internal scratch']
  %s0 = inlined_call_operand.vmem [shape: f32[12,8], index: 0, kind: input, shape index: {}]
  %s1 = inlined_call_operand.vmem [shape: f32[12,8], index: 1, kind: input, shape index: {}]
  %s2 = inlined_call_operand.vmem [shape: f32[12,8], index: 2, kind: input, shape index: {}]
  %s3 = inlined_call_operand.vmem [shape: f32[8,16], index: 3, kind: input, shape index: {}]
  %s4 = inlined_call_operand.vmem [shape: f32[8,16], index: 4, kind: input, shape index: {}]
  %s5 = inlined_call_operand.vmem [shape: f32[8,16], index: 5, kind: input, shape index: {}]
  %s6 = inlined_call_operand.vmem [shape: f32[16,2], index: 6, kind: input, shape index: {}]
  %s7 = inlined_call_operand.vmem [shape: f32[2,16], index: 7, kind: input, shape index: {}]
  %s8 = inlined_call_operand.vmem [shape: f32[12,16], index: 8, kind: output, shape index: {0}]
  %s9 = inlined_call_operand.vmem [shape: f32[12,2], index: 9, kind: output, shape index: {1}]
  %10 = xla_tuple %s8, %s9
  %s11 = sld [smem:[#allocation0]]
  $region50: #{k_half_forward.6} parent=0
    _
  %s13 = ssub.s32 1, %s11
  %s14 = scalar_select 0, %s13, %s11
  // Predicated region
  $region2: #{k_half_forward.6} parent=0 // pred_check
    _
  $region3: #{k_half_forward.6} parent=0 // pred_check_branch
    %16 = sbr.rel (0) target = $region5
  $region4: #{k_half_forward.6} parent=0 // pred_region
    _
  $region5: #{k_half_forward.6} parent=0 // pred_fallthru
    _
  // Predicated region
  $region6: #{k_half_forward.6} parent=0 // pred_check
    _
  $region7: #{k_half_forward.6} parent=0 // pred_check_branch
    %18 = sbr.rel (0) target = $region9
  $region8: #{k_half_forward.6} parent=0 // pred_region
    _
  $region9: #{k_half_forward.6} parent=0 // pred_fallthru
    _
  // Predicated region
  $region10: #{k_half_forward.6} parent=0 // pred_check
    _
  $region11: #{k_half_forward.6} parent=0 // pred_check_branch
    %20 = sbr.rel (0) target = $region13
  $region12: #{k_half_forward.6} parent=0 // pred_region
    _
  $region13: #{k_half_forward.6} parent=0 // pred_fallthru
    _
  // Predicated region
  $region14: #{k_half_forward.6} parent=0 // pred_check
    _
  $region15: #{k_half_forward.6} parent=0 // pred_check_branch
    %22 = sbr.rel (0) target = $region17
  $region16: #{k_half_forward.6} parent=0 // pred_region
    _
  $region17: #{k_half_forward.6} parent=0 // pred_fallthru
    _
  // Predicated region
  $region18: #{k_half_forward.6} parent=0 // pred_check
    _
  $region19: #{k_half_forward.6} parent=0 // pred_check_branch
    %24 = sbr.rel (0) target = $region21
  $region20: #{k_half_forward.6} parent=0 // pred_region
    _
  $region21: #{k_half_forward.6} parent=0 // pred_fallthru
    _
  // Predicated region
  $region22: #{k_half_forward.6} parent=0 // pred_check
    _
  $region23: #{k_half_forward.6} parent=0 // pred_check_branch
    %26 = sbr.rel (0) target = $region25
  $region24: #{k_half_forward.6} parent=0 // pred_region
    _
  $region25: #{k_half_forward.6} parent=0 // pred_fallthru
    _
  // Predicated region
  $region26: #{k_half_forward.6} parent=0 // pred_check
    _
  $region27: #{k_half_forward.6} parent=0 // pred_check_branch
    %28 = sbr.rel (0) target = $region29
  $region28: #{k_half_forward.6} parent=0 // pred_region
    _
  $region29: #{k_half_forward.6} parent=0 // pred_fallthru
    _
  // Predicated region
  $region30: #{k_half_forward.6} parent=0 // pred_check
    _
  $region31: #{k_half_forward.6} parent=0 // pred_check_branch
    %30 = sbr.rel (0) target = $region33
  $region32: #{k_half_forward.6} parent=0 // pred_region
    _
  $region33: #{k_half_forward.6} parent=0 // pred_fallthru
    _
  %v31 = vld [vmem:[%s0] sm:$0xff]
  %v32 = vld [vmem:[%s0 + $0x8] sm:$0xf]
  %v33 = vld [vmem:[%s3] sm:$0xff]
  %v34 = vld [vmem:[%s1] sm:$0xff]
  %v35 = vld [vmem:[%s1 + $0x8] sm:$0xf]
  %v36 = vld [vmem:[%s4] sm:$0xff]
  %vm37 = vcmask 64512
  %v39 = vsel %vm37, %v34, 0
  %v42 = vsel %vm37, %v35, 0
  %44 = vmatprep.subr.mxu0 0.0
  %45 = vmatpush1.msra.mxu0 0.0
  %46 = vmatprep.subr.mxu0 0.0
  %47 = vmatpush1.msra.mxu0 0.0
  %48 = vmatprep.subr.mxu0 0.0
  %49 = vmatpush1.msra.mxu0 0.0
  %50 = vmatprep.subr.mxu0 0.0
  %51 = vmatpush1.msra.mxu0 0.0
  %52 = vmatprep.subr.mxu0 0.0
  %53 = vmatpush1.msra.mxu0 0.0
  %54 = vmatprep.subr.mxu0 0.0
  %55 = vmatpush1.msra.mxu0 0.0
  %56 = vmatprep.subr.mxu0 0.0
  %57 = vmatpush1.msra.mxu0 0.0
  %58 = vmatprep.subr.mxu0 0.0
  %59 = vmatpush1.msra.mxu0 0.0
  %60 = vmatprep.subr.mxu0 0.0
  %61 = vmatpush1.msra.mxu0 0.0
  %62 = vmatprep.subr.mxu0 0.0
  %63 = vmatpush1.msra.mxu0 0.0
  %64 = vmatprep.subr.mxu0 0.0
  %65 = vmatpush1.msra.mxu0 0.0
  %66 = vmatprep.subr.mxu0 0.0
  %67 = vmatpush1.msra.mxu0 0.0
  %68 = vmatprep.subr.mxu0 0.0
  %69 = vmatpush1.msra.mxu0 0.0
  %70 = vmatprep.subr.mxu0 0.0
  %71 = vmatpush1.msra.mxu0 0.0
  %72 = vmatprep.subr.mxu0 0.0
  %73 = vmatpush1.msra.mxu0 0.0
  %74 = vmatprep.subr.mxu0 0.0
  %75 = vmatpush1.msra.mxu0 %v36
  %76 = vmatprep.subr.mxu0 0.0
  %77 = vmatpush2.msra.mxu0 0.0
  %78 = vmatprep.subr.mxu0 0.0
  %79 = vmatpush2.msra.mxu0 0.0
  %80 = vmatprep.subr.mxu0 0.0
  %81 = vmatpush2.msra.mxu0 0.0
  %82 = vmatprep.subr.mxu0 0.0
  %83 = vmatpush2.msra.mxu0 0.0
  %84 = vmatprep.subr.mxu0 0.0
  %85 = vmatpush2.msra.mxu0 0.0
  %86 = vmatprep.subr.mxu0 0.0
  %87 = vmatpush2.msra.mxu0 0.0
  %88 = vmatprep.subr.mxu0 0.0
  %89 = vmatpush2.msra.mxu0 0.0
  %90 = vmatprep.subr.mxu0 0.0
  %91 = vmatpush2.msra.mxu0 0.0
  %92 = vmatprep.subr.mxu0 0.0
  %93 = vmatpush2.msra.mxu0 0.0
  %94 = vmatprep.subr.mxu0 0.0
  %95 = vmatpush2.msra.mxu0 0.0
  %96 = vmatprep.subr.mxu0 0.0
  %97 = vmatpush2.msra.mxu0 0.0
  %98 = vmatprep.subr.mxu0 0.0
  %99 = vmatpush2.msra.mxu0 0.0
  %100 = vmatprep.subr.mxu0 0.0
  %101 = vmatpush2.msra.mxu0 0.0
  %102 = vmatprep.subr.mxu0 0.0
  %103 = vmatpush2.msra.mxu0 0.0
  %104 = vmatprep.subr.mxu0 0.0
  %105 = vmatpush2.msra.mxu0 0.0
  %106 = vmatprep.subr.mxu0 0.0
  %107 = vmatpush2.msra.mxu0 0.0
  %108 = vmatprep.mubr.f32.mxu0 0.0
  %109 = vmatmul.mubr.f32.gmra.mxu0 %v39
  %v110 = vpop.f32.mrf.mxu0
  %v111 = vadd.f32 0.0, %v110
  %v112 = vpop.f32.mrf.mxu0
  %113 = vmatprep.mubr.f32.mxu0 0.0
  %114 = vmatmul.mubr.f32.gmra.mxu0 %v42
  %v115 = vpop.f32.mrf.mxu0
  %v116 = vadd.f32 0.0, %v115
  %v117 = vpop.f32.mrf.mxu0
  %118 = vdwg.mxu0
  %v120 = vsel %vm37, %v31, 0
  %v123 = vsel %vm37, %v32, 0
  %125 = vmatprep.subr.mxu0 0.0
  %126 = vmatpush1.msra.mxu0 0.0
  %127 = vmatprep.subr.mxu0 0.0
  %128 = vmatpush1.msra.mxu0 0.0
  %129 = vmatprep.subr.mxu0 0.0
  %130 = vmatpush1.msra.mxu0 0.0
  %131 = vmatprep.subr.mxu0 0.0
  %132 = vmatpush1.msra.mxu0 0.0
  %133 = vmatprep.subr.mxu0 0.0
  %134 = vmatpush1.msra.mxu0 0.0
  %135 = vmatprep.subr.mxu0 0.0
  %136 = vmatpush1.msra.mxu0 0.0
  %137 = vmatprep.subr.mxu0 0.0
  %138 = vmatpush1.msra.mxu0 0.0
  %139 = vmatprep.subr.mxu0 0.0
  %140 = vmatpush1.msra.mxu0 0.0
  %141 = vmatprep.subr.mxu0 0.0
  %142 = vmatpush1.msra.mxu0 0.0
  %143 = vmatprep.subr.mxu0 0.0
  %144 = vmatpush1.msra.mxu0 0.0
  %145 = vmatprep.subr.mxu0 0.0
  %146 = vmatpush1.msra.mxu0 0.0
  %147 = vmatprep.subr.mxu0 0.0
  %148 = vmatpush1.msra.mxu0 0.0
  %149 = vmatprep.subr.mxu0 0.0
  %150 = vmatpush1.msra.mxu0 0.0
  %151 = vmatprep.subr.mxu0 0.0
  %152 = vmatpush1.msra.mxu0 0.0
  %153 = vmatprep.subr.mxu0 0.0
  %154 = vmatpush1.msra.mxu0 0.0
  %155 = vmatprep.subr.mxu0 0.0
  %156 = vmatpush1.msra.mxu0 %v33
  %157 = vmatprep.subr.mxu0 0.0
  %158 = vmatpush2.msra.mxu0 0.0
  %159 = vmatprep.subr.mxu0 0.0
  %160 = vmatpush2.msra.mxu0 0.0
  %161 = vmatprep.subr.mxu0 0.0
  %162 = vmatpush2.msra.mxu0 0.0
  %163 = vmatprep.subr.mxu0 0.0
  %164 = vmatpush2.msra.mxu0 0.0
  %165 = vmatprep.subr.mxu0 0.0
  %166 = vmatpush2.msra.mxu0 0.0
  %167 = vmatprep.subr.mxu0 0.0
  %168 = vmatpush2.msra.mxu0 0.0
  %169 = vmatprep.subr.mxu0 0.0
  %170 = vmatpush2.msra.mxu0 0.0
  %171 = vmatprep.subr.mxu0 0.0
  %172 = vmatpush2.msra.mxu0 0.0
  %173 = vmatprep.subr.mxu0 0.0
  %174 = vmatpush2.msra.mxu0 0.0
  %175 = vmatprep.subr.mxu0 0.0
  %176 = vmatpush2.msra.mxu0 0.0
  %177 = vmatprep.subr.mxu0 0.0
  %178 = vmatpush2.msra.mxu0 0.0
  %179 = vmatprep.subr.mxu0 0.0
  %180 = vmatpush2.msra.mxu0 0.0
  %181 = vmatprep.subr.mxu0 0.0
  %182 = vmatpush2.msra.mxu0 0.0
  %183 = vmatprep.subr.mxu0 0.0
  %184 = vmatpush2.msra.mxu0 0.0
  %185 = vmatprep.subr.mxu0 0.0
  %186 = vmatpush2.msra.mxu0 0.0
  %187 = vmatprep.subr.mxu0 0.0
  %188 = vmatpush2.msra.mxu0 0.0
  %189 = vmatprep.mubr.f32.mxu0 0.0
  %190 = vmatmul.mubr.f32.gmra.mxu0 %v120
  %v191 = vpop.f32.mrf.mxu0
  %v192 = vadd.f32 %v111, %v191
  %v193 = vpop.f32.mrf.mxu0
  %194 = vmatprep.mubr.f32.mxu0 0.0
  %195 = vmatmul.mubr.f32.gmra.mxu0 %v123
  %v196 = vpop.f32.mrf.mxu0
  %v197 = vadd.f32 %v116, %v196
  %v198 = vpop.f32.mrf.mxu0
  %199 = vdwg.mxu0
  %v200 = vld [vmem:[%s2] sm:$0xff]
  %v201 = vld [vmem:[%s2 + $0x8] sm:$0xf]
  %v202 = vld [vmem:[%s5] sm:$0xff]
  %v204 = vsel %vm37, %v200, 0
  %v207 = vsel %vm37, %v201, 0
  %209 = vmatprep.subr.mxu0 0.0
  %210 = vmatpush1.msra.mxu0 0.0
  %211 = vmatprep.subr.mxu0 0.0
  %212 = vmatpush1.msra.mxu0 0.0
  %213 = vmatprep.subr.mxu0 0.0
  %214 = vmatpush1.msra.mxu0 0.0
  %215 = vmatprep.subr.mxu0 0.0
  %216 = vmatpush1.msra.mxu0 0.0
  %217 = vmatprep.subr.mxu0 0.0
  %218 = vmatpush1.msra.mxu0 0.0
  %219 = vmatprep.subr.mxu0 0.0
  %220 = vmatpush1.msra.mxu0 0.0
  %221 = vmatprep.subr.mxu0 0.0
  %222 = vmatpush1.msra.mxu0 0.0
  %223 = vmatprep.subr.mxu0 0.0
  %224 = vmatpush1.msra.mxu0 0.0
  %225 = vmatprep.subr.mxu0 0.0
  %226 = vmatpush1.msra.mxu0 0.0
  %227 = vmatprep.subr.mxu0 0.0
  %228 = vmatpush1.msra.mxu0 0.0
  %229 = vmatprep.subr.mxu0 0.0
  %230 = vmatpush1.msra.mxu0 0.0
  %231 = vmatprep.subr.mxu0 0.0
  %232 = vmatpush1.msra.mxu0 0.0
  %233 = vmatprep.subr.mxu0 0.0
  %234 = vmatpush1.msra.mxu0 0.0
  %235 = vmatprep.subr.mxu0 0.0
  %236 = vmatpush1.msra.mxu0 0.0
  %237 = vmatprep.subr.mxu0 0.0
  %238 = vmatpush1.msra.mxu0 0.0
  %239 = vmatprep.subr.mxu0 0.0
  %240 = vmatpush1.msra.mxu0 %v202
  %241 = vmatprep.subr.mxu0 0.0
  %242 = vmatpush2.msra.mxu0 0.0
  %243 = vmatprep.subr.mxu0 0.0
  %244 = vmatpush2.msra.mxu0 0.0
  %245 = vmatprep.subr.mxu0 0.0
  %246 = vmatpush2.msra.mxu0 0.0
  %247 = vmatprep.subr.mxu0 0.0
  %248 = vmatpush2.msra.mxu0 0.0
  %249 = vmatprep.subr.mxu0 0.0
  %250 = vmatpush2.msra.mxu0 0.0
  %251 = vmatprep.subr.mxu0 0.0
  %252 = vmatpush2.msra.mxu0 0.0
  %253 = vmatprep.subr.mxu0 0.0
  %254 = vmatpush2.msra.mxu0 0.0
  %255 = vmatprep.subr.mxu0 0.0
  %256 = vmatpush2.msra.mxu0 0.0
  %257 = vmatprep.subr.mxu0 0.0
  %258 = vmatpush2.msra.mxu0 0.0
  %259 = vmatprep.subr.mxu0 0.0
  %260 = vmatpush2.msra.mxu0 0.0
  %261 = vmatprep.subr.mxu0 0.0
  %262 = vmatpush2.msra.mxu0 0.0
  %263 = vmatprep.subr.mxu0 0.0
  %264 = vmatpush2.msra.mxu0 0.0
  %265 = vmatprep.subr.mxu0 0.0
  %266 = vmatpush2.msra.mxu0 0.0
  %267 = vmatprep.subr.mxu0 0.0
  %268 = vmatpush2.msra.mxu0 0.0
  %269 = vmatprep.subr.mxu0 0.0
  %270 = vmatpush2.msra.mxu0 0.0
  %271 = vmatprep.subr.mxu0 0.0
  %272 = vmatpush2.msra.mxu0 0.0
  %273 = vmatprep.mubr.f32.mxu0 0.0
  %274 = vmatmul.mubr.f32.gmra.mxu0 %v204
  %v275 = vpop.f32.mrf.mxu0
  %v276 = vadd.f32 0.0, %v275
  %v277 = vpop.f32.mrf.mxu0
  %278 = vmatprep.mubr.f32.mxu0 0.0
  %279 = vmatmul.mubr.f32.gmra.mxu0 %v207
  %v280 = vpop.f32.mrf.mxu0
  %v281 = vadd.f32 0.0, %v280
  %v282 = vpop.f32.mrf.mxu0
  %283 = vdwg.mxu0
  %v284 = vadd.f32 %v192, %v276
  %v285 = vadd.f32 %v197, %v281
  %v286 = vld [vmem:[%s6] sm:$0xff]
  %v287 = vld [vmem:[%s6 + $0x8] sm:$0xff]
  %vm288 = vcmask 130048
  %v290 = vsel %vm288, %v284, 0
  %v293 = vsel %vm288, %v285, 0
  %295 = vmatprep.subr.mxu0 0.0
  %296 = vmatpush1.msra.mxu0 0.0
  %297 = vmatprep.subr.mxu0 0.0
  %298 = vmatpush1.msra.mxu0 0.0
  %299 = vmatprep.subr.mxu0 0.0
  %300 = vmatpush1.msra.mxu0 0.0
  %301 = vmatprep.subr.mxu0 0.0
  %302 = vmatpush1.msra.mxu0 0.0
  %303 = vmatprep.subr.mxu0 0.0
  %304 = vmatpush1.msra.mxu0 0.0
  %305 = vmatprep.subr.mxu0 0.0
  %306 = vmatpush1.msra.mxu0 0.0
  %307 = vmatprep.subr.mxu0 0.0
  %308 = vmatpush1.msra.mxu0 0.0
  %309 = vmatprep.subr.mxu0 0.0
  %310 = vmatpush1.msra.mxu0 0.0
  %311 = vmatprep.subr.mxu0 0.0
  %312 = vmatpush1.msra.mxu0 0.0
  %313 = vmatprep.subr.mxu0 0.0
  %314 = vmatpush1.msra.mxu0 0.0
  %315 = vmatprep.subr.mxu0 0.0
  %316 = vmatpush1.msra.mxu0 0.0
  %317 = vmatprep.subr.mxu0 0.0
  %318 = vmatpush1.msra.mxu0 0.0
  %319 = vmatprep.subr.mxu0 0.0
  %320 = vmatpush1.msra.mxu0 0.0
  %321 = vmatprep.subr.mxu0 0.0
  %322 = vmatpush1.msra.mxu0 0.0
  %323 = vmatprep.subr.mxu0 0.0
  %324 = vmatpush1.msra.mxu0 %v287
  %325 = vmatprep.subr.mxu0 0.0
  %326 = vmatpush1.msra.mxu0 %v286
  %327 = vmatprep.subr.mxu0 0.0
  %328 = vmatpush2.msra.mxu0 0.0
  %329 = vmatprep.subr.mxu0 0.0
  %330 = vmatpush2.msra.mxu0 0.0
  %331 = vmatprep.subr.mxu0 0.0
  %332 = vmatpush2.msra.mxu0 0.0
  %333 = vmatprep.subr.mxu0 0.0
  %334 = vmatpush2.msra.mxu0 0.0
  %335 = vmatprep.subr.mxu0 0.0
  %336 = vmatpush2.msra.mxu0 0.0
  %337 = vmatprep.subr.mxu0 0.0
  %338 = vmatpush2.msra.mxu0 0.0
  %339 = vmatprep.subr.mxu0 0.0
  %340 = vmatpush2.msra.mxu0 0.0
  %341 = vmatprep.subr.mxu0 0.0
  %342 = vmatpush2.msra.mxu0 0.0
  %343 = vmatprep.subr.mxu0 0.0
  %344 = vmatpush2.msra.mxu0 0.0
  %345 = vmatprep.subr.mxu0 0.0
  %346 = vmatpush2.msra.mxu0 0.0
  %347 = vmatprep.subr.mxu0 0.0
  %348 = vmatpush2.msra.mxu0 0.0
  %349 = vmatprep.subr.mxu0 0.0
  %350 = vmatpush2.msra.mxu0 0.0
  %351 = vmatprep.subr.mxu0 0.0
  %352 = vmatpush2.msra.mxu0 0.0
  %353 = vmatprep.subr.mxu0 0.0
  %354 = vmatpush2.msra.mxu0 0.0
  %355 = vmatprep.subr.mxu0 0.0
  %356 = vmatpush2.msra.mxu0 0.0
  %357 = vmatprep.subr.mxu0 0.0
  %358 = vmatpush2.msra.mxu0 0.0
  %359 = vmatprep.mubr.f32.mxu0 0.0
  %360 = vmatmul.mubr.f32.gmra.mxu0 %v290
  %v361 = vpop.f32.mrf.mxu0
  %v362 = vadd.f32 0.0, %v361
  %v363 = vpop.f32.mrf.mxu0
  %364 = vmatprep.mubr.f32.mxu0 0.0
  %365 = vmatmul.mubr.f32.gmra.mxu0 %v293
  %v366 = vpop.f32.mrf.mxu0
  %v367 = vadd.f32 0.0, %v366
  %v368 = vpop.f32.mrf.mxu0
  %369 = vdwg.mxu0
  %vm370 = vcmp.gt.f32.partialorder %v362, 0.0
  %vm371 = vcmp.gt.f32.partialorder %v367, 0.0
  %v372 = vmul.f32 %v362, 0.2
  %v373 = vmul.f32 %v367, 0.2
  %v374 = vsel %vm370, %v362, %v372
  %v375 = vsel %vm371, %v367, %v373
  %v376 = vsub.f32 0.0, %v374
  %v377 = vsub.f32 0.0, %v375
  %v378 = vmul.f32 %v376, 1.442695
  %v379 = vpow.pop %v378
  %v380 = vmul.f32 %v377, 1.442695
  %v381 = vpow.pop %v380
  %vm382 = vcmask 15360
  %383 = vst.msk [vmem:[%s9] sm:$0xff] %vm382, %v379
  %vm384 = vcmask 11264
  %385 = vst.msk [vmem:[%s9 + $0x8] sm:$0xf] %vm384, %v381
  %v386 = vld [vmem:[%s7] sm:$0x3]
  %v388 = vsel %vm382, %v379, 0
  %v391 = vsel %vm382, %v381, 0
  %vm393 = vcmask 1041408
  %v395 = vsel %vm393, %v386, 0
  %397 = vmatprep.subr.mxu0 0.0
  %398 = vmatpush1.msra.mxu0 0.0
  %399 = vmatprep.subr.mxu0 0.0
  %400 = vmatpush1.msra.mxu0 0.0
  %401 = vmatprep.subr.mxu0 0.0
  %402 = vmatpush1.msra.mxu0 0.0
  %403 = vmatprep.subr.mxu0 0.0
  %404 = vmatpush1.msra.mxu0 0.0
  %405 = vmatprep.subr.mxu0 0.0
  %406 = vmatpush1.msra.mxu0 0.0
  %407 = vmatprep.subr.mxu0 0.0
  %408 = vmatpush1.msra.mxu0 0.0
  %409 = vmatprep.subr.mxu0 0.0
  %410 = vmatpush1.msra.mxu0 0.0
  %411 = vmatprep.subr.mxu0 0.0
  %412 = vmatpush1.msra.mxu0 0.0
  %413 = vmatprep.subr.mxu0 0.0
  %414 = vmatpush1.msra.mxu0 0.0
  %415 = vmatprep.subr.mxu0 0.0
  %416 = vmatpush1.msra.mxu0 0.0
  %417 = vmatprep.subr.mxu0 0.0
  %418 = vmatpush1.msra.mxu0 0.0
  %419 = vmatprep.subr.mxu0 0.0
  %420 = vmatpush1.msra.mxu0 0.0
  %421 = vmatprep.subr.mxu0 0.0
  %422 = vmatpush1.msra.mxu0 0.0
  %423 = vmatprep.subr.mxu0 0.0
  %424 = vmatpush1.msra.mxu0 0.0
  %425 = vmatprep.subr.mxu0 0.0
  %426 = vmatpush1.msra.mxu0 0.0
  %427 = vmatprep.subr.mxu0 0.0
  %428 = vmatpush1.msra.mxu0 %v395
  %429 = vmatprep.subr.mxu0 0.0
  %430 = vmatpush2.msra.mxu0 0.0
  %431 = vmatprep.subr.mxu0 0.0
  %432 = vmatpush2.msra.mxu0 0.0
  %433 = vmatprep.subr.mxu0 0.0
  %434 = vmatpush2.msra.mxu0 0.0
  %435 = vmatprep.subr.mxu0 0.0
  %436 = vmatpush2.msra.mxu0 0.0
  %437 = vmatprep.subr.mxu0 0.0
  %438 = vmatpush2.msra.mxu0 0.0
  %439 = vmatprep.subr.mxu0 0.0
  %440 = vmatpush2.msra.mxu0 0.0
  %441 = vmatprep.subr.mxu0 0.0
  %442 = vmatpush2.msra.mxu0 0.0
  %443 = vmatprep.subr.mxu0 0.0
  %444 = vmatpush2.msra.mxu0 0.0
  %445 = vmatprep.subr.mxu0 0.0
  %446 = vmatpush2.msra.mxu0 0.0
  %447 = vmatprep.subr.mxu0 0.0
  %448 = vmatpush2.msra.mxu0 0.0
  %449 = vmatprep.subr.mxu0 0.0
  %450 = vmatpush2.msra.mxu0 0.0
  %451 = vmatprep.subr.mxu0 0.0
  %452 = vmatpush2.msra.mxu0 0.0
  %453 = vmatprep.subr.mxu0 0.0
  %454 = vmatpush2.msra.mxu0 0.0
  %455 = vmatprep.subr.mxu0 0.0
  %456 = vmatpush2.msra.mxu0 0.0
  %457 = vmatprep.subr.mxu0 0.0
  %458 = vmatpush2.msra.mxu0 0.0
  %459 = vmatprep.subr.mxu0 0.0
  %460 = vmatpush2.msra.mxu0 0.0
  %461 = vmatprep.mubr.f32.mxu0 0.0
  %462 = vmatmul.mubr.f32.gmra.mxu0 %v388
  %v463 = vpop.f32.mrf.mxu0
  %v464 = vadd.f32 0.0, %v463
  %v465 = vpop.f32.mrf.mxu0
  %466 = vmatprep.mubr.f32.mxu0 0.0
  %467 = vmatmul.mubr.f32.gmra.mxu0 %v391
  %v468 = vpop.f32.mrf.mxu0
  %v469 = vadd.f32 0.0, %v468
  %v470 = vpop.f32.mrf.mxu0
  %471 = vdwg.mxu0
  %v472 = vmul.f32 %v464, %v284
  %v473 = vmul.f32 %v469, %v285
  %474 = vst.msk [vmem:[%s8] sm:$0xff] %vm288, %v472
  %vm475 = vcmask 125952
  %476 = vst.msk [vmem:[%s8 + $0x8] sm:$0xf] %vm475, %v473
  // Predicated region
  $region34: #{k_half_forward.6} parent=0 // pred_check
    _
  $region35: #{k_half_forward.6} parent=0 // pred_check_branch
    %478 = sbr.rel (0) target = $region37
  $region36: #{k_half_forward.6} parent=0 // pred_region
    _
  $region37: #{k_half_forward.6} parent=0 // pred_fallthru
    _
  // Predicated region
  $region38: #{k_half_forward.6} parent=0 // pred_check
    _
  $region39: #{k_half_forward.6} parent=0 // pred_check_branch
    %480 = sbr.rel (0) target = $region41
  $region40: #{k_half_forward.6} parent=0 // pred_region
    _
  $region41: #{k_half_forward.6} parent=0 // pred_fallthru
    _
  // Predicated region
  $region42: #{k_half_forward.6} parent=0 // pred_check
    _
  $region43: #{k_half_forward.6} parent=0 // pred_check_branch
    %482 = sbr.rel (0) target = $region45
  $region44: #{k_half_forward.6} parent=0 // pred_region
    _
  $region45: #{k_half_forward.6} parent=0 // pred_fallthru
    _
  // Predicated region
  $region46: #{k_half_forward.6} parent=0 // pred_check
    _
  $region47: #{k_half_forward.6} parent=0 // pred_check_branch
    %484 = sbr.rel (0) target = $region49
  $region48: #{k_half_forward.6} parent=0 // pred_region
    _
  $region49: #{k_half_forward.6} parent=0 // pred_fallthru
    _

// kernel: k_half_forward.8
$region0: #{k_half_forward.8}
  #allocation0 [shape = 'u32[]', space=smem, size = 0x4, offset = 0x4, fixed_abs, tag = 'smem constant byte address 0x4 - core index']
  #allocation1 [shape = 'u32[144,128]{1,0:T(1,128)}', space=vmem, size = 0x12000, scoped, tag = 'internal scratch']
  %s0 = inlined_call_operand.vmem [shape: f32[12,16], index: 0, kind: input, shape index: {}]
  %s1 = inlined_call_operand.vmem [shape: f32[12,16], index: 1, kind: input, shape index: {}]
  %s2 = inlined_call_operand.vmem [shape: f32[12,8], index: 2, kind: input, shape index: {}]
  %s3 = inlined_call_operand.vmem [shape: f32[16,16], index: 3, kind: input, shape index: {}]
  %s4 = inlined_call_operand.vmem [shape: f32[16,16], index: 4, kind: input, shape index: {}]
  %s5 = inlined_call_operand.vmem [shape: f32[8,16], index: 5, kind: input, shape index: {}]
  %s6 = inlined_call_operand.vmem [shape: f32[16,1], index: 6, kind: input, shape index: {}]
  %s7 = inlined_call_operand.vmem [shape: f32[1,16], index: 7, kind: input, shape index: {}]
  %s8 = inlined_call_operand.vmem [shape: f32[12,16], index: 8, kind: output, shape index: {0}]
  %s9 = inlined_call_operand.vmem [shape: f32[12,1], index: 9, kind: output, shape index: {1}]
  %10 = xla_tuple %s8, %s9
  %s11 = sld [smem:[#allocation0]]
  $region50: #{k_half_forward.8} parent=0
    _
  %s13 = ssub.s32 1, %s11
  %s14 = scalar_select 0, %s13, %s11
  // Predicated region
  $region2: #{k_half_forward.8} parent=0 // pred_check
    _
  $region3: #{k_half_forward.8} parent=0 // pred_check_branch
    %16 = sbr.rel (0) target = $region5
  $region4: #{k_half_forward.8} parent=0 // pred_region
    _
  $region5: #{k_half_forward.8} parent=0 // pred_fallthru
    _
  // Predicated region
  $region6: #{k_half_forward.8} parent=0 // pred_check
    _
  $region7: #{k_half_forward.8} parent=0 // pred_check_branch
    %18 = sbr.rel (0) target = $region9
  $region8: #{k_half_forward.8} parent=0 // pred_region
    _
  $region9: #{k_half_forward.8} parent=0 // pred_fallthru
    _
  // Predicated region
  $region10: #{k_half_forward.8} parent=0 // pred_check
    _
  $region11: #{k_half_forward.8} parent=0 // pred_check_branch
    %20 = sbr.rel (0) target = $region13
  $region12: #{k_half_forward.8} parent=0 // pred_region
    _
  $region13: #{k_half_forward.8} parent=0 // pred_fallthru
    _
  // Predicated region
  $region14: #{k_half_forward.8} parent=0 // pred_check
    _
  $region15: #{k_half_forward.8} parent=0 // pred_check_branch
    %22 = sbr.rel (0) target = $region17
  $region16: #{k_half_forward.8} parent=0 // pred_region
    _
  $region17: #{k_half_forward.8} parent=0 // pred_fallthru
    _
  // Predicated region
  $region18: #{k_half_forward.8} parent=0 // pred_check
    _
  $region19: #{k_half_forward.8} parent=0 // pred_check_branch
    %24 = sbr.rel (0) target = $region21
  $region20: #{k_half_forward.8} parent=0 // pred_region
    _
  $region21: #{k_half_forward.8} parent=0 // pred_fallthru
    _
  // Predicated region
  $region22: #{k_half_forward.8} parent=0 // pred_check
    _
  $region23: #{k_half_forward.8} parent=0 // pred_check_branch
    %26 = sbr.rel (0) target = $region25
  $region24: #{k_half_forward.8} parent=0 // pred_region
    _
  $region25: #{k_half_forward.8} parent=0 // pred_fallthru
    _
  // Predicated region
  $region26: #{k_half_forward.8} parent=0 // pred_check
    _
  $region27: #{k_half_forward.8} parent=0 // pred_check_branch
    %28 = sbr.rel (0) target = $region29
  $region28: #{k_half_forward.8} parent=0 // pred_region
    _
  $region29: #{k_half_forward.8} parent=0 // pred_fallthru
    _
  // Predicated region
  $region30: #{k_half_forward.8} parent=0 // pred_check
    _
  $region31: #{k_half_forward.8} parent=0 // pred_check_branch
    %30 = sbr.rel (0) target = $region33
  $region32: #{k_half_forward.8} parent=0 // pred_region
    _
  $region33: #{k_half_forward.8} parent=0 // pred_fallthru
    _
  %v31 = vld [vmem:[%s0] sm:$0xff]
  %v32 = vld [vmem:[%s0 + $0x8] sm:$0xf]
  %v33 = vld [vmem:[%s3] sm:$0xff]
  %v34 = vld [vmem:[%s3 + $0x8] sm:$0xff]
  %v35 = vld [vmem:[%s1] sm:$0xff]
  %v36 = vld [vmem:[%s1 + $0x8] sm:$0xf]
  %v37 = vld [vmem:[%s4] sm:$0xff]
  %v38 = vld [vmem:[%s4 + $0x8] sm:$0xff]
  %vm39 = vcmask 130048
  %v41 = vsel %vm39, %v35, 0
  %v44 = vsel %vm39, %v36, 0
  %46 = vmatprep.subr.mxu0 0.0
  %47 = vmatpush1.msra.mxu0 0.0
  %48 = vmatprep.subr.mxu0 0.0
  %49 = vmatpush1.msra.mxu0 0.0
  %50 = vmatprep.subr.mxu0 0.0
  %51 = vmatpush1.msra.mxu0 0.0
  %52 = vmatprep.subr.mxu0 0.0
  %53 = vmatpush1.msra.mxu0 0.0
  %54 = vmatprep.subr.mxu0 0.0
  %55 = vmatpush1.msra.mxu0 0.0
  %56 = vmatprep.subr.mxu0 0.0
  %57 = vmatpush1.msra.mxu0 0.0
  %58 = vmatprep.subr.mxu0 0.0
  %59 = vmatpush1.msra.mxu0 0.0
  %60 = vmatprep.subr.mxu0 0.0
  %61 = vmatpush1.msra.mxu0 0.0
  %62 = vmatprep.subr.mxu0 0.0
  %63 = vmatpush1.msra.mxu0 0.0
  %64 = vmatprep.subr.mxu0 0.0
  %65 = vmatpush1.msra.mxu0 0.0
  %66 = vmatprep.subr.mxu0 0.0
  %67 = vmatpush1.msra.mxu0 0.0
  %68 = vmatprep.subr.mxu0 0.0
  %69 = vmatpush1.msra.mxu0 0.0
  %70 = vmatprep.subr.mxu0 0.0
  %71 = vmatpush1.msra.mxu0 0.0
  %72 = vmatprep.subr.mxu0 0.0
  %73 = vmatpush1.msra.mxu0 0.0
  %74 = vmatprep.subr.mxu0 0.0
  %75 = vmatpush1.msra.mxu0 %v38
  %76 = vmatprep.subr.mxu0 0.0
  %77 = vmatpush1.msra.mxu0 %v37
  %78 = vmatprep.subr.mxu0 0.0
  %79 = vmatpush2.msra.mxu0 0.0
  %80 = vmatprep.subr.mxu0 0.0
  %81 = vmatpush2.msra.mxu0 0.0
  %82 = vmatprep.subr.mxu0 0.0
  %83 = vmatpush2.msra.mxu0 0.0
  %84 = vmatprep.subr.mxu0 0.0
  %85 = vmatpush2.msra.mxu0 0.0
  %86 = vmatprep.subr.mxu0 0.0
  %87 = vmatpush2.msra.mxu0 0.0
  %88 = vmatprep.subr.mxu0 0.0
  %89 = vmatpush2.msra.mxu0 0.0
  %90 = vmatprep.subr.mxu0 0.0
  %91 = vmatpush2.msra.mxu0 0.0
  %92 = vmatprep.subr.mxu0 0.0
  %93 = vmatpush2.msra.mxu0 0.0
  %94 = vmatprep.subr.mxu0 0.0
  %95 = vmatpush2.msra.mxu0 0.0
  %96 = vmatprep.subr.mxu0 0.0
  %97 = vmatpush2.msra.mxu0 0.0
  %98 = vmatprep.subr.mxu0 0.0
  %99 = vmatpush2.msra.mxu0 0.0
  %100 = vmatprep.subr.mxu0 0.0
  %101 = vmatpush2.msra.mxu0 0.0
  %102 = vmatprep.subr.mxu0 0.0
  %103 = vmatpush2.msra.mxu0 0.0
  %104 = vmatprep.subr.mxu0 0.0
  %105 = vmatpush2.msra.mxu0 0.0
  %106 = vmatprep.subr.mxu0 0.0
  %107 = vmatpush2.msra.mxu0 0.0
  %108 = vmatprep.subr.mxu0 0.0
  %109 = vmatpush2.msra.mxu0 0.0
  %110 = vmatprep.mubr.f32.mxu0 0.0
  %111 = vmatmul.mubr.f32.gmra.mxu0 %v41
  %v112 = vpop.f32.mrf.mxu0
  %v113 = vadd.f32 0.0, %v112
  %v114 = vpop.f32.mrf.mxu0
  %115 = vmatprep.mubr.f32.mxu0 0.0
  %116 = vmatmul.mubr.f32.gmra.mxu0 %v44
  %v117 = vpop.f32.mrf.mxu0
  %v118 = vadd.f32 0.0, %v117
  %v119 = vpop.f32.mrf.mxu0
  %120 = vdwg.mxu0
  %v122 = vsel %vm39, %v31, 0
  %v125 = vsel %vm39, %v32, 0
  %127 = vmatprep.subr.mxu0 0.0
  %128 = vmatpush1.msra.mxu0 0.0
  %129 = vmatprep.subr.mxu0 0.0
  %130 = vmatpush1.msra.mxu0 0.0
  %131 = vmatprep.subr.mxu0 0.0
  %132 = vmatpush1.msra.mxu0 0.0
  %133 = vmatprep.subr.mxu0 0.0
  %134 = vmatpush1.msra.mxu0 0.0
  %135 = vmatprep.subr.mxu0 0.0
  %136 = vmatpush1.msra.mxu0 0.0
  %137 = vmatprep.subr.mxu0 0.0
  %138 = vmatpush1.msra.mxu0 0.0
  %139 = vmatprep.subr.mxu0 0.0
  %140 = vmatpush1.msra.mxu0 0.0
  %141 = vmatprep.subr.mxu0 0.0
  %142 = vmatpush1.msra.mxu0 0.0
  %143 = vmatprep.subr.mxu0 0.0
  %144 = vmatpush1.msra.mxu0 0.0
  %145 = vmatprep.subr.mxu0 0.0
  %146 = vmatpush1.msra.mxu0 0.0
  %147 = vmatprep.subr.mxu0 0.0
  %148 = vmatpush1.msra.mxu0 0.0
  %149 = vmatprep.subr.mxu0 0.0
  %150 = vmatpush1.msra.mxu0 0.0
  %151 = vmatprep.subr.mxu0 0.0
  %152 = vmatpush1.msra.mxu0 0.0
  %153 = vmatprep.subr.mxu0 0.0
  %154 = vmatpush1.msra.mxu0 0.0
  %155 = vmatprep.subr.mxu0 0.0
  %156 = vmatpush1.msra.mxu0 %v34
  %157 = vmatprep.subr.mxu0 0.0
  %158 = vmatpush1.msra.mxu0 %v33
  %159 = vmatprep.subr.mxu0 0.0
  %160 = vmatpush2.msra.mxu0 0.0
  %161 = vmatprep.subr.mxu0 0.0
  %162 = vmatpush2.msra.mxu0 0.0
  %163 = vmatprep.subr.mxu0 0.0
  %164 = vmatpush2.msra.mxu0 0.0
  %165 = vmatprep.subr.mxu0 0.0
  %166 = vmatpush2.msra.mxu0 0.0
  %167 = vmatprep.subr.mxu0 0.0
  %168 = vmatpush2.msra.mxu0 0.0
  %169 = vmatprep.subr.mxu0 0.0
  %170 = vmatpush2.msra.mxu0 0.0
  %171 = vmatprep.subr.mxu0 0.0
  %172 = vmatpush2.msra.mxu0 0.0
  %173 = vmatprep.subr.mxu0 0.0
  %174 = vmatpush2.msra.mxu0 0.0
  %175 = vmatprep.subr.mxu0 0.0
  %176 = vmatpush2.msra.mxu0 0.0
  %177 = vmatprep.subr.mxu0 0.0
  %178 = vmatpush2.msra.mxu0 0.0
  %179 = vmatprep.subr.mxu0 0.0
  %180 = vmatpush2.msra.mxu0 0.0
  %181 = vmatprep.subr.mxu0 0.0
  %182 = vmatpush2.msra.mxu0 0.0
  %183 = vmatprep.subr.mxu0 0.0
  %184 = vmatpush2.msra.mxu0 0.0
  %185 = vmatprep.subr.mxu0 0.0
  %186 = vmatpush2.msra.mxu0 0.0
  %187 = vmatprep.subr.mxu0 0.0
  %188 = vmatpush2.msra.mxu0 0.0
  %189 = vmatprep.subr.mxu0 0.0
  %190 = vmatpush2.msra.mxu0 0.0
  %191 = vmatprep.mubr.f32.mxu0 0.0
  %192 = vmatmul.mubr.f32.gmra.mxu0 %v122
  %v193 = vpop.f32.mrf.mxu0
  %v194 = vadd.f32 %v113, %v193
  %v195 = vpop.f32.mrf.mxu0
  %196 = vmatprep.mubr.f32.mxu0 0.0
  %197 = vmatmul.mubr.f32.gmra.mxu0 %v125
  %v198 = vpop.f32.mrf.mxu0
  %v199 = vadd.f32 %v118, %v198
  %v200 = vpop.f32.mrf.mxu0
  %201 = vdwg.mxu0
  %v202 = vld [vmem:[%s2] sm:$0xff]
  %v203 = vld [vmem:[%s2 + $0x8] sm:$0xf]
  %v204 = vld [vmem:[%s5] sm:$0xff]
  %vm205 = vcmask 64512
  %v207 = vsel %vm205, %v202, 0
  %v210 = vsel %vm205, %v203, 0
  %212 = vmatprep.subr.mxu0 0.0
  %213 = vmatpush1.msra.mxu0 0.0
  %214 = vmatprep.subr.mxu0 0.0
  %215 = vmatpush1.msra.mxu0 0.0
  %216 = vmatprep.subr.mxu0 0.0
  %217 = vmatpush1.msra.mxu0 0.0
  %218 = vmatprep.subr.mxu0 0.0
  %219 = vmatpush1.msra.mxu0 0.0
  %220 = vmatprep.subr.mxu0 0.0
  %221 = vmatpush1.msra.mxu0 0.0
  %222 = vmatprep.subr.mxu0 0.0
  %223 = vmatpush1.msra.mxu0 0.0
  %224 = vmatprep.subr.mxu0 0.0
  %225 = vmatpush1.msra.mxu0 0.0
  %226 = vmatprep.subr.mxu0 0.0
  %227 = vmatpush1.msra.mxu0 0.0
  %228 = vmatprep.subr.mxu0 0.0
  %229 = vmatpush1.msra.mxu0 0.0
  %230 = vmatprep.subr.mxu0 0.0
  %231 = vmatpush1.msra.mxu0 0.0
  %232 = vmatprep.subr.mxu0 0.0
  %233 = vmatpush1.msra.mxu0 0.0
  %234 = vmatprep.subr.mxu0 0.0
  %235 = vmatpush1.msra.mxu0 0.0
  %236 = vmatprep.subr.mxu0 0.0
  %237 = vmatpush1.msra.mxu0 0.0
  %238 = vmatprep.subr.mxu0 0.0
  %239 = vmatpush1.msra.mxu0 0.0
  %240 = vmatprep.subr.mxu0 0.0
  %241 = vmatpush1.msra.mxu0 0.0
  %242 = vmatprep.subr.mxu0 0.0
  %243 = vmatpush1.msra.mxu0 %v204
  %244 = vmatprep.subr.mxu0 0.0
  %245 = vmatpush2.msra.mxu0 0.0
  %246 = vmatprep.subr.mxu0 0.0
  %247 = vmatpush2.msra.mxu0 0.0
  %248 = vmatprep.subr.mxu0 0.0
  %249 = vmatpush2.msra.mxu0 0.0
  %250 = vmatprep.subr.mxu0 0.0
  %251 = vmatpush2.msra.mxu0 0.0
  %252 = vmatprep.subr.mxu0 0.0
  %253 = vmatpush2.msra.mxu0 0.0
  %254 = vmatprep.subr.mxu0 0.0
  %255 = vmatpush2.msra.mxu0 0.0
  %256 = vmatprep.subr.mxu0 0.0
  %257 = vmatpush2.msra.mxu0 0.0
  %258 = vmatprep.subr.mxu0 0.0
  %259 = vmatpush2.msra.mxu0 0.0
  %260 = vmatprep.subr.mxu0 0.0
  %261 = vmatpush2.msra.mxu0 0.0
  %262 = vmatprep.subr.mxu0 0.0
  %263 = vmatpush2.msra.mxu0 0.0
  %264 = vmatprep.subr.mxu0 0.0
  %265 = vmatpush2.msra.mxu0 0.0
  %266 = vmatprep.subr.mxu0 0.0
  %267 = vmatpush2.msra.mxu0 0.0
  %268 = vmatprep.subr.mxu0 0.0
  %269 = vmatpush2.msra.mxu0 0.0
  %270 = vmatprep.subr.mxu0 0.0
  %271 = vmatpush2.msra.mxu0 0.0
  %272 = vmatprep.subr.mxu0 0.0
  %273 = vmatpush2.msra.mxu0 0.0
  %274 = vmatprep.subr.mxu0 0.0
  %275 = vmatpush2.msra.mxu0 0.0
  %276 = vmatprep.mubr.f32.mxu0 0.0
  %277 = vmatmul.mubr.f32.gmra.mxu0 %v207
  %v278 = vpop.f32.mrf.mxu0
  %v279 = vadd.f32 0.0, %v278
  %v280 = vpop.f32.mrf.mxu0
  %281 = vmatprep.mubr.f32.mxu0 0.0
  %282 = vmatmul.mubr.f32.gmra.mxu0 %v210
  %v283 = vpop.f32.mrf.mxu0
  %v284 = vadd.f32 0.0, %v283
  %v285 = vpop.f32.mrf.mxu0
  %286 = vdwg.mxu0
  %v287 = vadd.f32 %v194, %v279
  %v288 = vadd.f32 %v199, %v284
  %v289 = vld [vmem:[%s6] sm:$0xff]
  %v290 = vld [vmem:[%s6 + $0x8] sm:$0xff]
  %v292 = vsel %vm39, %v287, 0
  %v295 = vsel %vm39, %v288, 0
  %297 = vmatprep.subr.mxu0 0.0
  %298 = vmatpush1.msra.mxu0 0.0
  %299 = vmatprep.subr.mxu0 0.0
  %300 = vmatpush1.msra.mxu0 0.0
  %301 = vmatprep.subr.mxu0 0.0
  %302 = vmatpush1.msra.mxu0 0.0
  %303 = vmatprep.subr.mxu0 0.0
  %304 = vmatpush1.msra.mxu0 0.0
  %305 = vmatprep.subr.mxu0 0.0
  %306 = vmatpush1.msra.mxu0 0.0
  %307 = vmatprep.subr.mxu0 0.0
  %308 = vmatpush1.msra.mxu0 0.0
  %309 = vmatprep.subr.mxu0 0.0
  %310 = vmatpush1.msra.mxu0 0.0
  %311 = vmatprep.subr.mxu0 0.0
  %312 = vmatpush1.msra.mxu0 0.0
  %313 = vmatprep.subr.mxu0 0.0
  %314 = vmatpush1.msra.mxu0 0.0
  %315 = vmatprep.subr.mxu0 0.0
  %316 = vmatpush1.msra.mxu0 0.0
  %317 = vmatprep.subr.mxu0 0.0
  %318 = vmatpush1.msra.mxu0 0.0
  %319 = vmatprep.subr.mxu0 0.0
  %320 = vmatpush1.msra.mxu0 0.0
  %321 = vmatprep.subr.mxu0 0.0
  %322 = vmatpush1.msra.mxu0 0.0
  %323 = vmatprep.subr.mxu0 0.0
  %324 = vmatpush1.msra.mxu0 0.0
  %325 = vmatprep.subr.mxu0 0.0
  %326 = vmatpush1.msra.mxu0 %v290
  %327 = vmatprep.subr.mxu0 0.0
  %328 = vmatpush1.msra.mxu0 %v289
  %329 = vmatprep.subr.mxu0 0.0
  %330 = vmatpush2.msra.mxu0 0.0
  %331 = vmatprep.subr.mxu0 0.0
  %332 = vmatpush2.msra.mxu0 0.0
  %333 = vmatprep.subr.mxu0 0.0
  %334 = vmatpush2.msra.mxu0 0.0
  %335 = vmatprep.subr.mxu0 0.0
  %336 = vmatpush2.msra.mxu0 0.0
  %337 = vmatprep.subr.mxu0 0.0
  %338 = vmatpush2.msra.mxu0 0.0
  %339 = vmatprep.subr.mxu0 0.0
  %340 = vmatpush2.msra.mxu0 0.0
  %341 = vmatprep.subr.mxu0 0.0
  %342 = vmatpush2.msra.mxu0 0.0
  %343 = vmatprep.subr.mxu0 0.0
  %344 = vmatpush2.msra.mxu0 0.0
  %345 = vmatprep.subr.mxu0 0.0
  %346 = vmatpush2.msra.mxu0 0.0
  %347 = vmatprep.subr.mxu0 0.0
  %348 = vmatpush2.msra.mxu0 0.0
  %349 = vmatprep.subr.mxu0 0.0
  %350 = vmatpush2.msra.mxu0 0.0
  %351 = vmatprep.subr.mxu0 0.0
  %352 = vmatpush2.msra.mxu0 0.0
  %353 = vmatprep.subr.mxu0 0.0
  %354 = vmatpush2.msra.mxu0 0.0
  %355 = vmatprep.subr.mxu0 0.0
  %356 = vmatpush2.msra.mxu0 0.0
  %357 = vmatprep.subr.mxu0 0.0
  %358 = vmatpush2.msra.mxu0 0.0
  %359 = vmatprep.subr.mxu0 0.0
  %360 = vmatpush2.msra.mxu0 0.0
  %361 = vmatprep.mubr.f32.mxu0 0.0
  %362 = vmatmul.mubr.f32.gmra.mxu0 %v292
  %v363 = vpop.f32.mrf.mxu0
  %v364 = vadd.f32 0.0, %v363
  %v365 = vpop.f32.mrf.mxu0
  %366 = vmatprep.mubr.f32.mxu0 0.0
  %367 = vmatmul.mubr.f32.gmra.mxu0 %v295
  %v368 = vpop.f32.mrf.mxu0
  %v369 = vadd.f32 0.0, %v368
  %v370 = vpop.f32.mrf.mxu0
  %371 = vdwg.mxu0
  %vm372 = vcmp.gt.f32.partialorder %v364, 0.0
  %vm373 = vcmp.gt.f32.partialorder %v369, 0.0
  %v374 = vmul.f32 %v364, 0.2
  %v375 = vmul.f32 %v369, 0.2
  %v376 = vsel %vm372, %v364, %v374
  %v377 = vsel %vm373, %v369, %v375
  %v378 = vsub.f32 0.0, %v376
  %v379 = vsub.f32 0.0, %v377
  %v380 = vmul.f32 %v378, 1.442695
  %v381 = vpow.pop %v380
  %v382 = vmul.f32 %v379, 1.442695
  %v383 = vpow.pop %v382
  %vm384 = vcmask 7168
  %385 = vst.msk [vmem:[%s9] sm:$0xff] %vm384, %v381
  %vm386 = vcmask 3072
  %387 = vst.msk [vmem:[%s9 + $0x8] sm:$0xf] %vm386, %v383
  %v388 = vld [vmem:[%s7] sm:$0x1]
  %v390 = vsel %vm384, %v381, 0
  %v393 = vsel %vm384, %v383, 0
  %vm395 = vcmask 1040384
  %v397 = vsel %vm395, %v388, 0
  %399 = vmatprep.subr.mxu0 0.0
  %400 = vmatpush1.msra.mxu0 0.0
  %401 = vmatprep.subr.mxu0 0.0
  %402 = vmatpush1.msra.mxu0 0.0
  %403 = vmatprep.subr.mxu0 0.0
  %404 = vmatpush1.msra.mxu0 0.0
  %405 = vmatprep.subr.mxu0 0.0
  %406 = vmatpush1.msra.mxu0 0.0
  %407 = vmatprep.subr.mxu0 0.0
  %408 = vmatpush1.msra.mxu0 0.0
  %409 = vmatprep.subr.mxu0 0.0
  %410 = vmatpush1.msra.mxu0 0.0
  %411 = vmatprep.subr.mxu0 0.0
  %412 = vmatpush1.msra.mxu0 0.0
  %413 = vmatprep.subr.mxu0 0.0
  %414 = vmatpush1.msra.mxu0 0.0
  %415 = vmatprep.subr.mxu0 0.0
  %416 = vmatpush1.msra.mxu0 0.0
  %417 = vmatprep.subr.mxu0 0.0
  %418 = vmatpush1.msra.mxu0 0.0
  %419 = vmatprep.subr.mxu0 0.0
  %420 = vmatpush1.msra.mxu0 0.0
  %421 = vmatprep.subr.mxu0 0.0
  %422 = vmatpush1.msra.mxu0 0.0
  %423 = vmatprep.subr.mxu0 0.0
  %424 = vmatpush1.msra.mxu0 0.0
  %425 = vmatprep.subr.mxu0 0.0
  %426 = vmatpush1.msra.mxu0 0.0
  %427 = vmatprep.subr.mxu0 0.0
  %428 = vmatpush1.msra.mxu0 0.0
  %429 = vmatprep.subr.mxu0 0.0
  %430 = vmatpush1.msra.mxu0 %v397
  %431 = vmatprep.subr.mxu0 0.0
  %432 = vmatpush2.msra.mxu0 0.0
  %433 = vmatprep.subr.mxu0 0.0
  %434 = vmatpush2.msra.mxu0 0.0
  %435 = vmatprep.subr.mxu0 0.0
  %436 = vmatpush2.msra.mxu0 0.0
  %437 = vmatprep.subr.mxu0 0.0
  %438 = vmatpush2.msra.mxu0 0.0
  %439 = vmatprep.subr.mxu0 0.0
  %440 = vmatpush2.msra.mxu0 0.0
  %441 = vmatprep.subr.mxu0 0.0
  %442 = vmatpush2.msra.mxu0 0.0
  %443 = vmatprep.subr.mxu0 0.0
  %444 = vmatpush2.msra.mxu0 0.0
  %445 = vmatprep.subr.mxu0 0.0
  %446 = vmatpush2.msra.mxu0 0.0
  %447 = vmatprep.subr.mxu0 0.0
  %448 = vmatpush2.msra.mxu0 0.0
  %449 = vmatprep.subr.mxu0 0.0
  %450 = vmatpush2.msra.mxu0 0.0
  %451 = vmatprep.subr.mxu0 0.0
  %452 = vmatpush2.msra.mxu0 0.0
  %453 = vmatprep.subr.mxu0 0.0
  %454 = vmatpush2.msra.mxu0 0.0
  %455 = vmatprep.subr.mxu0 0.0
  %456 = vmatpush2.msra.mxu0 0.0
  %457 = vmatprep.subr.mxu0 0.0
  %458 = vmatpush2.msra.mxu0 0.0
  %459 = vmatprep.subr.mxu0 0.0
  %460 = vmatpush2.msra.mxu0 0.0
  %461 = vmatprep.subr.mxu0 0.0
  %462 = vmatpush2.msra.mxu0 0.0
  %463 = vmatprep.mubr.f32.mxu0 0.0
  %464 = vmatmul.mubr.f32.gmra.mxu0 %v390
  %v465 = vpop.f32.mrf.mxu0
  %v466 = vadd.f32 0.0, %v465
  %v467 = vpop.f32.mrf.mxu0
  %468 = vmatprep.mubr.f32.mxu0 0.0
  %469 = vmatmul.mubr.f32.gmra.mxu0 %v393
  %v470 = vpop.f32.mrf.mxu0
  %v471 = vadd.f32 0.0, %v470
  %v472 = vpop.f32.mrf.mxu0
  %473 = vdwg.mxu0
  %v474 = vmul.f32 %v466, %v287
  %v475 = vmul.f32 %v471, %v288
  %476 = vst.msk [vmem:[%s8] sm:$0xff] %vm39, %v474
  %vm477 = vcmask 125952
  %478 = vst.msk [vmem:[%s8 + $0x8] sm:$0xf] %vm477, %v475
  // Predicated region
  $region34: #{k_half_forward.8} parent=0 // pred_check
    _
  $region35: #{k_half_forward.8} parent=0 // pred_check_branch
    %480 = sbr.rel (0) target = $region37
  $region36: #{k_half_forward.8} parent=0 // pred_region
    _
  $region37: #{k_half_forward.8} parent=0 // pred_fallthru
    _
  // Predicated region
  $region38: #{k_half_forward.8} parent=0 // pred_check
    _
  $region39: #{k_half_forward.8} parent=0 // pred_check_branch
    %482 = sbr.rel (0) target = $region41
  $region40: #{k_half_forward.8} parent=0 // pred_region
    _
  $region41: #{k_half_forward.8} parent=0 // pred_fallthru
    _
  // Predicated region
  $region42: #{k_half_forward.8} parent=0 // pred_check
    _
  $region43: #{k_half_forward.8} parent=0 // pred_check_branch
    %484 = sbr.rel (0) target = $region45
  $region44: #{k_half_forward.8} parent=0 // pred_region
    _
  $region45: #{k_half_forward.8} parent=0 // pred_fallthru
    _
  // Predicated region
  $region46: #{k_half_forward.8} parent=0 // pred_check
    _
  $region47: #{k_half_forward.8} parent=0 // pred_check_branch
    %486 = sbr.rel (0) target = $region49
  $region48: #{k_half_forward.8} parent=0 // pred_region
    _
  $region49: #{k_half_forward.8} parent=0 // pred_fallthru
    _

// kernel: k_half_forward.9
$region0: #{k_half_forward.9}
  #allocation0 [shape = 'u32[]', space=smem, size = 0x4, offset = 0x4, fixed_abs, tag = 'smem constant byte address 0x4 - core index']
  #allocation1 [shape = 'u32[144,128]{1,0:T(1,128)}', space=vmem, size = 0x12000, scoped, tag = 'internal scratch']
  %s0 = inlined_call_operand.vmem [shape: f32[16,16], index: 0, kind: input, shape index: {}]
  %s1 = inlined_call_operand.vmem [shape: f32[16,1], index: 1, kind: input, shape index: {}]
  %s2 = inlined_call_operand.vmem [shape: f32[1,16], index: 2, kind: input, shape index: {}]
  %s3 = inlined_call_operand.vmem [shape: f32[16,16], index: 3, kind: output, shape index: {}]
  %s4 = sld [smem:[#allocation0]]
  $region22: #{k_half_forward.9} parent=0
    _
  %s6 = ssub.s32 1, %s4
  %s7 = scalar_select 0, %s6, %s4
  // Predicated region
  $region2: #{k_half_forward.9} parent=0 // pred_check
    _
  $region3: #{k_half_forward.9} parent=0 // pred_check_branch
    %9 = sbr.rel (0) target = $region5
  $region4: #{k_half_forward.9} parent=0 // pred_region
    _
  $region5: #{k_half_forward.9} parent=0 // pred_fallthru
    _
  // Predicated region
  $region6: #{k_half_forward.9} parent=0 // pred_check
    _
  $region7: #{k_half_forward.9} parent=0 // pred_check_branch
    %11 = sbr.rel (0) target = $region9
  $region8: #{k_half_forward.9} parent=0 // pred_region
    _
  $region9: #{k_half_forward.9} parent=0 // pred_fallthru
    _
  // Predicated region
  $region10: #{k_half_forward.9} parent=0 // pred_check
    _
  $region11: #{k_half_forward.9} parent=0 // pred_check_branch
    %13 = sbr.rel (0) target = $region13
  $region12: #{k_half_forward.9} parent=0 // pred_region
    _
  $region13: #{k_half_forward.9} parent=0 // pred_fallthru
    _
  %v14 = vld [vmem:[%s1] sm:$0xff]
  %v15 = vld [vmem:[%s1 + $0x8] sm:$0xff]
  %vm16 = vcmp.eq.f32.partialorder %v14, 0.0
  %vm17 = vcmp.eq.f32.partialorder %v15, 0.0
  %v18 = vsel %vm16, 1e-12, %v14
  %v19 = vsel %vm17, 1e-12, %v15
  %v20 = vld [vmem:[%s2] sm:$0x1]
  %vm21 = vcmask 7168
  %v23 = vsel %vm21, %v18, 0
  %v26 = vsel %vm21, %v19, 0
  %vm28 = vcmask 1040384
  %v30 = vsel %vm28, %v20, 0
  %32 = vmatprep.subr.mxu0 0.0
  %33 = vmatpush1.msra.mxu0 0.0
  %34 = vmatprep.subr.mxu0 0.0
  %35 = vmatpush1.msra.mxu0 0.0
  %36 = vmatprep.subr.mxu0 0.0
  %37 = vmatpush1.msra.mxu0 0.0
  %38 = vmatprep.subr.mxu0 0.0
  %39 = vmatpush1.msra.mxu0 0.0
  %40 = vmatprep.subr.mxu0 0.0
  %41 = vmatpush1.msra.mxu0 0.0
  %42 = vmatprep.subr.mxu0 0.0
  %43 = vmatpush1.msra.mxu0 0.0
  %44 = vmatprep.subr.mxu0 0.0
  %45 = vmatpush1.msra.mxu0 0.0
  %46 = vmatprep.subr.mxu0 0.0
  %47 = vmatpush1.msra.mxu0 0.0
  %48 = vmatprep.subr.mxu0 0.0
  %49 = vmatpush1.msra.mxu0 0.0
  %50 = vmatprep.subr.mxu0 0.0
  %51 = vmatpush1.msra.mxu0 0.0
  %52 = vmatprep.subr.mxu0 0.0
  %53 = vmatpush1.msra.mxu0 0.0
  %54 = vmatprep.subr.mxu0 0.0
  %55 = vmatpush1.msra.mxu0 0.0
  %56 = vmatprep.subr.mxu0 0.0
  %57 = vmatpush1.msra.mxu0 0.0
  %58 = vmatprep.subr.mxu0 0.0
  %59 = vmatpush1.msra.mxu0 0.0
  %60 = vmatprep.subr.mxu0 0.0
  %61 = vmatpush1.msra.mxu0 0.0
  %62 = vmatprep.subr.mxu0 0.0
  %63 = vmatpush1.msra.mxu0 %v30
  %64 = vmatprep.subr.mxu0 0.0
  %65 = vmatpush2.msra.mxu0 0.0
  %66 = vmatprep.subr.mxu0 0.0
  %67 = vmatpush2.msra.mxu0 0.0
  %68 = vmatprep.subr.mxu0 0.0
  %69 = vmatpush2.msra.mxu0 0.0
  %70 = vmatprep.subr.mxu0 0.0
  %71 = vmatpush2.msra.mxu0 0.0
  %72 = vmatprep.subr.mxu0 0.0
  %73 = vmatpush2.msra.mxu0 0.0
  %74 = vmatprep.subr.mxu0 0.0
  %75 = vmatpush2.msra.mxu0 0.0
  %76 = vmatprep.subr.mxu0 0.0
  %77 = vmatpush2.msra.mxu0 0.0
  %78 = vmatprep.subr.mxu0 0.0
  %79 = vmatpush2.msra.mxu0 0.0
  %80 = vmatprep.subr.mxu0 0.0
  %81 = vmatpush2.msra.mxu0 0.0
  %82 = vmatprep.subr.mxu0 0.0
  %83 = vmatpush2.msra.mxu0 0.0
  %84 = vmatprep.subr.mxu0 0.0
  %85 = vmatpush2.msra.mxu0 0.0
  %86 = vmatprep.subr.mxu0 0.0
  %87 = vmatpush2.msra.mxu0 0.0
  %88 = vmatprep.subr.mxu0 0.0
  %89 = vmatpush2.msra.mxu0 0.0
  %90 = vmatprep.subr.mxu0 0.0
  %91 = vmatpush2.msra.mxu0 0.0
  %92 = vmatprep.subr.mxu0 0.0
  %93 = vmatpush2.msra.mxu0 0.0
  %94 = vmatprep.subr.mxu0 0.0
  %95 = vmatpush2.msra.mxu0 0.0
  %96 = vmatprep.mubr.f32.mxu0 0.0
  %97 = vmatmul.mubr.f32.gmra.mxu0 %v23
  %v98 = vpop.f32.mrf.mxu0
  %v99 = vadd.f32 0.0, %v98
  %v100 = vpop.f32.mrf.mxu0
  %101 = vmatprep.mubr.f32.mxu0 0.0
  %102 = vmatmul.mubr.f32.gmra.mxu0 %v26
  %v103 = vpop.f32.mrf.mxu0
  %v104 = vadd.f32 0.0, %v103
  %v105 = vpop.f32.mrf.mxu0
  %106 = vdwg.mxu0
  %v107 = vld [vmem:[%s0] sm:$0xff]
  %v108 = vld [vmem:[%s0 + $0x8] sm:$0xff]
  %v109 = vrcp.pop %v99
  %v110 = vrcp.pop %v104
  %v111 = vmul.f32 %v107, %v109
  %v112 = vmul.f32 %v108, %v110
  %vm113 = vcmp.gt.f32.partialorder %v111, 0.0
  %vm114 = vcmp.gt.f32.partialorder %v112, 0.0
  %v115 = vmul.f32 %v111, 1.442695
  %v116 = vpow.pop %v115
  %v117 = vmul.f32 %v112, 1.442695
  %v118 = vpow.pop %v117
  %v119 = vsub.f32 %v116, 1.0
  %v120 = vsub.f32 %v118, 1.0
  %v121 = vsel %vm113, %v111, %v119
  %v122 = vsel %vm114, %v112, %v120
  %vm123 = vcmask 130048
  %124 = vst.msk [vmem:[%s3] sm:$0xff] %vm123, %v121
  %125 = vst.msk [vmem:[%s3 + $0x8] sm:$0xff] %vm123, %v122
  // Predicated region
  $region14: #{k_half_forward.9} parent=0 // pred_check
    _
  $region15: #{k_half_forward.9} parent=0 // pred_check_branch
    %127 = sbr.rel (0) target = $region17
  $region16: #{k_half_forward.9} parent=0 // pred_region
    _
  $region17: #{k_half_forward.9} parent=0 // pred_fallthru
    _
  // Predicated region
  $region18: #{k_half_forward.9} parent=0 // pred_check
    _
  $region19: #{k_half_forward.9} parent=0 // pred_check_branch
    %129 = sbr.rel (0) target = $region21
  $region20: #{k_half_forward.9} parent=0 // pred_region
    _
  $region21: #{k_half_forward.9} parent=0 // pred_fallthru
    _

// kernel: k_half_forward.10
$region0: #{k_half_forward.10}
  #allocation0 [shape = 'u32[]', space=smem, size = 0x4, offset = 0x4, fixed_abs, tag = 'smem constant byte address 0x4 - core index']
  #allocation1 [shape = 'u32[144,128]{1,0:T(1,128)}', space=vmem, size = 0x12000, scoped, tag = 'internal scratch']
  %s0 = inlined_call_operand.vmem [shape: f32[4,1], index: 0, kind: input, shape index: {}]
  %s1 = inlined_call_operand.vmem [shape: f32[1,8], index: 1, kind: input, shape index: {}]
  %s2 = inlined_call_operand.vmem [shape: f32[1,8], index: 2, kind: input, shape index: {}]
  %s3 = inlined_call_operand.vmem [shape: f32[4,8], index: 3, kind: output, shape index: {}]
  %s4 = sld [smem:[#allocation0]]
  $region22: #{k_half_forward.10} parent=0
    _
  %s6 = ssub.s32 1, %s4
  %s7 = scalar_select 0, %s6, %s4
  // Predicated region
  $region2: #{k_half_forward.10} parent=0 // pred_check
    _
  $region3: #{k_half_forward.10} parent=0 // pred_check_branch
    %9 = sbr.rel (0) target = $region5
  $region4: #{k_half_forward.10} parent=0 // pred_region
    _
  $region5: #{k_half_forward.10} parent=0 // pred_fallthru
    _
  // Predicated region
  $region6: #{k_half_forward.10} parent=0 // pred_check
    _
  $region7: #{k_half_forward.10} parent=0 // pred_check_branch
    %11 = sbr.rel (0) target = $region9
  $region8: #{k_half_forward.10} parent=0 // pred_region
    _
  $region9: #{k_half_forward.10} parent=0 // pred_fallthru
    _
  // Predicated region
  $region10: #{k_half_forward.10} parent=0 // pred_check
    _
  $region11: #{k_half_forward.10} parent=0 // pred_check_branch
    %13 = sbr.rel (0) target = $region13
  $region12: #{k_half_forward.10} parent=0 // pred_region
    _
  $region13: #{k_half_forward.10} parent=0 // pred_fallthru
    _
  %v14 = vld [vmem:[%s0] sm:$0xf]
  %v15 = vld [vmem:[%s1] sm:$0x1]
  %17 = vset.pattern.permute.xlu0 0
  %18 = vperm.xlu0 %17, %v14
  %v19 = vpop.permute.xlu0 %18
  %v22 = vlaneseq
  %v23 = vshrl.u32 %v22, 7
  %v24 = vsub.s32 0, %v23
  %v25 = vrot.slane %v15, %v24
  %v27 = vmul.f32 %v19, %v25
  %v28 = vld [vmem:[%s2] sm:$0x1]
  %v30 = vlaneseq
  %v31 = vshrl.u32 %v30, 7
  %v32 = vsub.s32 0, %v31
  %v33 = vrot.slane %v28, %v32
  %v35 = vadd.f32 %v27, %v33
  %v36 = vand.u32 2147483647, %v35
  %vm37 = vcmp.le.f32.partialorder %v36, 0.7853982
  %vm38 = vcmp.lt.s32.totalorder %v35, 0
  %v39 = vand.u32 %v35, 2139095040
  %v40 = vshrl.u32 %v39, 23
  %v41 = vsub.s32 %v40, 127
  %v42 = vand.u32 2147483647, %v35
  %v43 = vand.u32 %v42, 8388607
  %v44 = vor.u32 %v43, 8388608
  %v45 = vsub.s32 0, %v44
  %v46 = vadd.s32 %v41, 1
  %vm47 = vcmp.gt.s32.totalorder %v46, 0
  %v48 = vsel %vm47, %v46, 0
  %v49 = vshrl.u32 %v48, 5
  %v50 = vand.u32 %v48, 31
  %v51 = vsub.s32 32, %v50
  %v52 = vshrl.u32 683565275, %v51
  %v53 = vshll.u32 683565275, %v50
  %v54 = vshrl.u32 2475754826, %v51
  %v55 = vor.u32 %v53, %v54
  %v56 = vshll.u32 2475754826, %v50
  %v57 = vshrl.u32 2131351028, %v51
  %v58 = vor.u32 %v56, %v57
  %v59 = vshll.u32 2131351028, %v50
  %v60 = vshrl.u32 2102212464, %v51
  %v61 = vor.u32 %v59, %v60
  %v62 = vshll.u32 2102212464, %v50
  %v63 = vshrl.u32 920167782, %v51
  %v64 = vor.u32 %v62, %v63
  %v65 = vshll.u32 920167782, %v50
  %v66 = vshrl.u32 1326507024, %v51
  %v67 = vor.u32 %v65, %v66
  %vm68 = vcmp.lt.s32.totalorder %v49, 1
  %vm69 = vcmp.lt.s32.totalorder %v49, 2
  %vm70 = vcmp.lt.s32.totalorder %v49, 3
  %vm71 = vcmp.lt.s32.totalorder %v49, 4
  %v72 = vsel %vm68, %v52, %v55
  %v73 = vsel %vm71, %v61, 2102212464
  %v74 = vsel %vm70, %v58, %v73
  %v75 = vsel %vm69, %v72, %v74
  %v76 = vsel %vm68, %v55, %v58
  %v77 = vsel %vm71, %v64, 920167782
  %v78 = vsel %vm70, %v61, %v77
  %v79 = vsel %vm69, %v76, %v78
  %v80 = vsel %vm68, %v58, %v61
  %v81 = vsel %vm71, %v67, 1326507024
  %v82 = vsel %vm70, %v64, %v81
  %v83 = vsel %vm69, %v80, %v82
  %v84 = vshll.u32 %v44, 8
  %v85 = vmul.u32.u64.compose %v84, %v83
  %v86 = vextract.low.u32 %v85
  %v87 = vextract.high.u32 %v85
  %v88 = vmul.u32.u64.compose %v84, %v79
  %v89 = vextract.low.u32 %v88
  %v90 = vextract.high.u32 %v88
  %v91 = vmul.u32 %v84, %v75
  %v92 = vadd.s32 %v87, %v89
  %vm93 = vc.u32 %v87, %v89
  %v94 = vadd.s32 %v90, 1
  %v95 = vsel %vm93, %v94, %v90
  %v96 = vadd.s32 %v91, %v95
  %v97 = vadd.s32 %v96, 536870912
  %v98 = vshrl.u32 %v97, 30
  %v99 = vshll.u32 %v98, 30
  %v100 = vsub.s32 %v96, %v99
  %vm101 = vcmp.lt.s32.totalorder %v100, 0
  %v102 = vsub.s32 0, %v100
  %v103 = vsel %vm101, %v102, %v100
  %v104 = vclz %v103
  %v105 = vsub.s32 %v104, 2
  %vm106 = vcmp.gt.s32.totalorder 0, %v105
  %v107 = vsel %vm106, 0, %v105
  %v108 = vsub.s32 32, %v107
  %v109 = vshll.u32 %v100, %v107
  %v110 = vshrl.u32 %v92, %v108
  %v111 = vor.u32 %v109, %v110
  %v112 = vsub.s32 4294967266, %v107
  %v113 = vadd.s32 %v112, 127
  %v114 = vshll.u32 %v113, 23
  %v115 = vor.u32 4788187, %v114
  %v116 = vand.u32 2147483647, %v115
  %v118 = vcvt.s32.f32 %v111
  %v119 = vmul.f32 %v118, %v116
  %v120 = vxor.u32 %v119, 2147483648
  %v121 = vsel %vm38, %v120, %v119
  %v122 = vsub.s32 4, %v98
  %v123 = vsel %vm38, %v122, %v98
  %v124 = vsel %vm37, %v35, %v121
  %v125 = vsel %vm37, 0, %v123
  %v126 = vcosq.f32.pop %v124
  %v127 = vsinq.f32.pop %v124
  %vm128 = vweird.f32 %v35
  %v129 = vand.u32 %v125, 3
  %vm130 = vcmp.lt.s32.totalorder %v129, 2
  %vm131 = vcmp.eq.s32.totalorder %v129, 0
  %v132 = vxor.u32 %v127, 2147483648
  %v133 = vsel %vm131, %v126, %v132
  %vm134 = vcmp.eq.s32.totalorder %v129, 2
  %v135 = vxor.u32 %v126, 2147483648
  %v136 = vsel %vm134, %v135, %v127
  %v137 = vsel %vm130, %v133, %v136
  %v138 = vsel %vm128, nan, %v137
  %vm139 = vcmask 60416
  %140 = vst.msk [vmem:[%s3] sm:$0xf] %vm139, %v138
  // Predicated region
  $region14: #{k_half_forward.10} parent=0 // pred_check
    _
  $region15: #{k_half_forward.10} parent=0 // pred_check_branch
    %142 = sbr.rel (0) target = $region17
  $region16: #{k_half_forward.10} parent=0 // pred_region
    _
  $region17: #{k_half_forward.10} parent=0 // pred_fallthru
    _
  // Predicated region
  $region18: #{k_half_forward.10} parent=0 // pred_check
    _
  $region19: #{k_half_forward.10} parent=0 // pred_check_branch
    %144 = sbr.rel (0) target = $region21
  $region20: #{k_half_forward.10} parent=0 // pred_region
    _
  $region21: #{k_half_forward.10} parent=0 // pred_fallthru
    _

// kernel: k_half_forward.11
$region0: #{k_half_forward.11}
  #allocation0 [shape = 'u32[]', space=smem, size = 0x4, offset = 0x4, fixed_abs, tag = 'smem constant byte address 0x4 - core index']
  #allocation1 [shape = 'u32[144,128]{1,0:T(1,128)}', space=vmem, size = 0x12000, scoped, tag = 'internal scratch']
  %s0 = inlined_call_operand.vmem [shape: f32[16,8], index: 0, kind: input, shape index: {}]
  %s1 = inlined_call_operand.vmem [shape: f32[8,16], index: 1, kind: input, shape index: {}]
  %s2 = inlined_call_operand.vmem [shape: f32[16,16], index: 2, kind: input, shape index: {}]
  %s3 = inlined_call_operand.vmem [shape: f32[16,1], index: 3, kind: input, shape index: {}]
  %s4 = inlined_call_operand.hbm [shape: f32[16,16], index: 4, kind: output, shape index: {}]
  %s5 = sld [smem:[#allocation0]]
  $region26: #{k_half_forward.11} parent=0
    _
  %s7 = ssub.s32 1, %s5
  %s8 = scalar_select 0, %s7, %s5
  $region1: #{k_half_forward.11} parent=0
    #allocation2 [shape = 'u8[8192]{0}', space=vmem, size = 0x2000, scoped, tag = 'output window, operand 0, single buffered']
    #allocation3 [shape = 's32[1]{0}', space=sflag, size = 0x4, scoped, tag = 'scoped memory for k_half_forward.11']
    %9 = vsyncpa [#allocation3], 0
    // Predicated region
    $region2: #{k_half_forward.11} parent=1 // pred_check
      _
    $region3: #{k_half_forward.11} parent=1 // pred_check_branch
      %11 = sbr.rel (0) target = $region5
    $region4: #{k_half_forward.11} parent=1 // pred_region
      _
    $region5: #{k_half_forward.11} parent=1 // pred_fallthru
      _
    // Predicated region
    $region6: #{k_half_forward.11} parent=1 // pred_check
      _
    $region7: #{k_half_forward.11} parent=1 // pred_check_branch
      %13 = sbr.rel (0) target = $region9
    $region8: #{k_half_forward.11} parent=1 // pred_region
      _
    $region9: #{k_half_forward.11} parent=1 // pred_fallthru
      _
    // Predicated region
    $region10: #{k_half_forward.11} parent=1 // pred_check
      _
    $region11: #{k_half_forward.11} parent=1 // pred_check_branch
      %15 = sbr.rel (0) target = $region13
    $region12: #{k_half_forward.11} parent=1 // pred_region
      _
    $region13: #{k_half_forward.11} parent=1 // pred_fallthru
      _
    // Predicated region
    $region14: #{k_half_forward.11} parent=1 // pred_check
      _
    $region15: #{k_half_forward.11} parent=1 // pred_check_branch
      %17 = sbr.rel (0) target = $region17
    $region16: #{k_half_forward.11} parent=1 // pred_region
      _
    $region17: #{k_half_forward.11} parent=1 // pred_fallthru
      _
    %v18 = vld [vmem:[%s0] sm:$0xff]
    %v19 = vld [vmem:[%s0 + $0x8] sm:$0xff]
    %v20 = vmul.f32 %v18, %v18
    %v21 = vmul.f32 %v19, %v19
    %vm22 = vcmask 64512
    %v23 = vsel %vm22, %v20, 0.0
    %24 = vadd.xlane.f32.xlu0 %v23
    %v25 = vpop.xlane.xlu0 %24
    %v26 = vsel %vm22, %v21, 0.0
    %27 = vadd.xlane.f32.xlu0 %v26
    %v28 = vpop.xlane.xlu0 %27
    %v29 = vmax.f32 %v25, 1e-24
    %v30 = vmax.f32 %v28, 1e-24
    %v31 = vrsqrt.pop %v29
    %v32 = vrsqrt.pop %v30
    %v33 = vmul.f32 %v18, %v31
    %v34 = vmul.f32 %v19, %v32
    %v35 = vld [vmem:[%s1] sm:$0xff]
    %v36 = vld [vmem:[%s3] sm:$0xff]
    %v37 = vld [vmem:[%s3 + $0x8] sm:$0xff]
    %v38 = vld [vmem:[%s2] sm:$0xff]
    %v39 = vld [vmem:[%s2 + $0x8] sm:$0xff]
    %41 = vset.pattern.permute.xlu0 0
    %42 = vperm.xlu0 %41, %v36
    %v43 = vpop.permute.xlu0 %42
    %46 = vset.pattern.permute.xlu0 0
    %47 = vperm.xlu0 %46, %v37
    %v48 = vpop.permute.xlu0 %47
    %v50 = vmul.f32 %v43, %v38
    %v51 = vmul.f32 %v48, %v39
    %v53 = vsel %vm22, %v33, 0
    %v56 = vsel %vm22, %v34, 0
    %58 = vmatprep.subr.mxu0 0.0
    %59 = vmatpush1.msra.mxu0 0.0
    %60 = vmatprep.subr.mxu0 0.0
    %61 = vmatpush1.msra.mxu0 0.0
    %62 = vmatprep.subr.mxu0 0.0
    %63 = vmatpush1.msra.mxu0 0.0
    %64 = vmatprep.subr.mxu0 0.0
    %65 = vmatpush1.msra.mxu0 0.0
    %66 = vmatprep.subr.mxu0 0.0
    %67 = vmatpush1.msra.mxu0 0.0
    %68 = vmatprep.subr.mxu0 0.0
    %69 = vmatpush1.msra.mxu0 0.0
    %70 = vmatprep.subr.mxu0 0.0
    %71 = vmatpush1.msra.mxu0 0.0
    %72 = vmatprep.subr.mxu0 0.0
    %73 = vmatpush1.msra.mxu0 0.0
    %74 = vmatprep.subr.mxu0 0.0
    %75 = vmatpush1.msra.mxu0 0.0
    %76 = vmatprep.subr.mxu0 0.0
    %77 = vmatpush1.msra.mxu0 0.0
    %78 = vmatprep.subr.mxu0 0.0
    %79 = vmatpush1.msra.mxu0 0.0
    %80 = vmatprep.subr.mxu0 0.0
    %81 = vmatpush1.msra.mxu0 0.0
    %82 = vmatprep.subr.mxu0 0.0
    %83 = vmatpush1.msra.mxu0 0.0
    %84 = vmatprep.subr.mxu0 0.0
    %85 = vmatpush1.msra.mxu0 0.0
    %86 = vmatprep.subr.mxu0 0.0
    %87 = vmatpush1.msra.mxu0 0.0
    %88 = vmatprep.subr.mxu0 0.0
    %89 = vmatpush1.msra.mxu0 %v35
    %90 = vmatprep.subr.mxu0 0.0
    %91 = vmatpush2.msra.mxu0 0.0
    %92 = vmatprep.subr.mxu0 0.0
    %93 = vmatpush2.msra.mxu0 0.0
    %94 = vmatprep.subr.mxu0 0.0
    %95 = vmatpush2.msra.mxu0 0.0
    %96 = vmatprep.subr.mxu0 0.0
    %97 = vmatpush2.msra.mxu0 0.0
    %98 = vmatprep.subr.mxu0 0.0
    %99 = vmatpush2.msra.mxu0 0.0
    %100 = vmatprep.subr.mxu0 0.0
    %101 = vmatpush2.msra.mxu0 0.0
    %102 = vmatprep.subr.mxu0 0.0
    %103 = vmatpush2.msra.mxu0 0.0
    %104 = vmatprep.subr.mxu0 0.0
    %105 = vmatpush2.msra.mxu0 0.0
    %106 = vmatprep.subr.mxu0 0.0
    %107 = vmatpush2.msra.mxu0 0.0
    %108 = vmatprep.subr.mxu0 0.0
    %109 = vmatpush2.msra.mxu0 0.0
    %110 = vmatprep.subr.mxu0 0.0
    %111 = vmatpush2.msra.mxu0 0.0
    %112 = vmatprep.subr.mxu0 0.0
    %113 = vmatpush2.msra.mxu0 0.0
    %114 = vmatprep.subr.mxu0 0.0
    %115 = vmatpush2.msra.mxu0 0.0
    %116 = vmatprep.subr.mxu0 0.0
    %117 = vmatpush2.msra.mxu0 0.0
    %118 = vmatprep.subr.mxu0 0.0
    %119 = vmatpush2.msra.mxu0 0.0
    %120 = vmatprep.subr.mxu0 0.0
    %121 = vmatpush2.msra.mxu0 0.0
    %122 = vmatprep.mubr.f32.mxu0 0.0
    %123 = vmatmul.mubr.f32.gmra.mxu0 %v53
    %v124 = vpop.f32.mrf.mxu0
    %v125 = vadd.f32 %v50, %v124
    %v126 = vpop.f32.mrf.mxu0
    %127 = vmatprep.mubr.f32.mxu0 0.0
    %128 = vmatmul.mubr.f32.gmra.mxu0 %v56
    %v129 = vpop.f32.mrf.mxu0
    %v130 = vadd.f32 %v51, %v129
    %v131 = vpop.f32.mrf.mxu0
    %132 = vdwg.mxu0
    %v133 = vmul.f32 %v125, %v125
    %v134 = vmul.f32 %v130, %v130
    %vm135 = vcmask 130048
    %v136 = vsel %vm135, %v133, 0.0
    %137 = vadd.xlane.f32.xlu0 %v136
    %v138 = vpop.xlane.xlu0 %137
    %v139 = vsel %vm135, %v134, 0.0
    %140 = vadd.xlane.f32.xlu0 %v139
    %v141 = vpop.xlane.xlu0 %140
    %v142 = vmax.f32 %v138, 1e-24
    %v143 = vmax.f32 %v141, 1e-24
    %v144 = vrsqrt.pop %v142
    %v145 = vrsqrt.pop %v143
    %v146 = vmul.f32 %v125, %v144
    %v147 = vmul.f32 %v130, %v145
    %148 = vst.msk [vmem:[#allocation2] sm:$0xff] %vm135, %v146
    %149 = vst.msk [vmem:[#allocation2 + $0x8] sm:$0xff] %vm135, %v147
    // Predicated region
    $region18: #{k_half_forward.11} parent=1 // pred_check
      _
    $region19: #{k_half_forward.11} parent=1 // pred_check_branch
      %151 = sbr.rel (0) target = $region21
    $region20: #{k_half_forward.11} parent=1 // pred_region
      %s153 = ssub.s32 256, 256
      %154 = vsyncadd [#allocation3], %s153
      %s155 = sshll.u32 [#allocation2], 4
      %s156 = int_to_ptr.vmem [resolvable:$true] %s155
      %161 = dma.vmem_to_hbm [thread:$0]  %s156, 256, %s4, [#allocation3], 128, 128, 8
    $region21: #{k_half_forward.11} parent=1 // pred_fallthru
      _
    // Predicated region
    $region22: #{k_half_forward.11} parent=1 // pred_check
      _
    $region23: #{k_half_forward.11} parent=1 // pred_check_branch
      %163 = sbr.rel (0) target = $region25
    $region24: #{k_half_forward.11} parent=1 // pred_region
      %164 = dma.done [#allocation3], 256
    $region25: #{k_half_forward.11} parent=1 // pred_fallthru
      _
    %165 = vsyncpa [#allocation3], 1

</llo_original>
